<compile_context>
chip_gen: v6e
topology: v6e:2x2x1
jax: 0.10.0
libtpu: 0.0.40
codegen_flags: <defaults>
</compile_context>

<pallas_src>
import jax
import jax.numpy as jnp
from jax.experimental import pallas as pl
from jax.experimental.pallas import tpu as pltpu

LANE = 128
SUBLANE = 8


def _round_up(n, m):
    return ((n + m - 1) // m) * m


def _cdiv(a, b):
    return (a + b - 1) // b


# --------------------------------------------------------------------------
# Kernel
# --------------------------------------------------------------------------
def _mlp_kernel(x_ref, w1_ref, b1_ref, w2_ref, b2_ref, o_ref):
    # Layer 1: bf16 MXU matmul with f32 accumulation, f32 bias, ReLU.
    h = jnp.dot(x_ref[...], w1_ref[...], preferred_element_type=jnp.float32)
    h = jnp.maximum(h + b1_ref[...], 0.0)
    # Layer 2 into a lane-dense 128-wide padded slab; store bf16 to halve
    # output HBM writeback (kernel is HBM-bound on v6e/v7x).
    o = jnp.dot(h.astype(w2_ref.dtype), w2_ref[...],
                preferred_element_type=jnp.float32)
    o_ref[...] = (o + b2_ref[...]).astype(o_ref.dtype)


# --------------------------------------------------------------------------
# Tiling / layout helpers
# --------------------------------------------------------------------------
def choose_batch_tile(batch, *, block_b=1024, min_steps=4):
    """Batch tile: multiple of 8 sublanes, capped at block_b rows, and small
    enough that the batch grid has >= min_steps steps when the batch allows it
    (megacore sharding on v7x + DMA/compute overlap)."""
    tb = _round_up(max(1, _cdiv(batch, min_steps)), SUBLANE)
    tb = max(SUBLANE, min(block_b, tb))
    bp = _round_up(batch, tb)
    return tb, bp


def prepare_input(x, padded_batch, padded_features):
    """Producer-side layout prep: zero-pad x to (Bp, Kp) and cast to bf16.
    In a real pipeline this is done ONCE where x is produced (amortized across
    calls); it must NOT be re-done per forward call."""
    b, f = x.shape
    xp = jnp.zeros((padded_batch, padded_features), jnp.bfloat16)
    return xp.at[:b, :f].set(x.astype(jnp.bfloat16))


# --------------------------------------------------------------------------
# Kernel launch (padded layout in, padded bf16 slab out)
# --------------------------------------------------------------------------
def learning_group_padded(xp, w1p, b1p, w2p, b2p, tb):
    """xp: (Bp, Kp) bf16 with Bp % tb == 0. Returns the padded bf16 output
    slab (Bp, Np); consumers slice/fuse the logical columns themselves."""
    Bp, Kp = xp.shape
    Kp2, Hp = w1p.shape
    Hp2, Np = w2p.shape
    assert Kp == Kp2 and Hp == Hp2 and Bp % tb == 0
    grid = (Bp // tb,)

    flops = 2 * Bp * (Kp * Hp + Hp * Np)
    bytes_accessed = (xp.size * 2 + w1p.size * 2 + w2p.size * 2
                      + b1p.size * 4 + b2p.size * 4 + Bp * Np * 2)

    return pl.pallas_call(
        _mlp_kernel,
        out_shape=jax.ShapeDtypeStruct((Bp, Np), jnp.bfloat16),
        grid=grid,
        in_specs=[
            pl.BlockSpec((tb, Kp), lambda i: (i, 0)),   # x: pipelined batch tiles
            pl.BlockSpec((Kp, Hp), lambda i: (0, 0)),   # W1: VMEM-resident (revisited)
            pl.BlockSpec((1, Hp), lambda i: (0, 0)),    # b1: resident
            pl.BlockSpec((Hp, Np), lambda i: (0, 0)),   # W2: resident
            pl.BlockSpec((1, Np), lambda i: (0, 0)),    # b2: resident
        ],
        out_specs=pl.BlockSpec((tb, Np), lambda i: (i, 0)),
        compiler_params=pltpu.CompilerParams(
            dimension_semantics=("parallel",),          # megacore on v7x; harmless elsewhere
        ),
        cost_estimate=pl.CostEstimate(
            flops=flops, transcendentals=0, bytes_accessed=bytes_accessed),
    )(xp, w1p, b1p, w2p, b2p)


def learning_group_forward(x, w1p, b1p, w2p, b2p, *, output_size,
                           block_b=1024, min_steps=4):
    """PyTorch-parity convenience wrapper: (B, input_size) f32 -> (B, output_size) f32.
    For production, keep x in the padded bf16 layout at the producer and consume
    the padded slab from learning_group_padded directly: the pad and slice here
    are pure layout plumbing that cost extra HBM passes."""
    B, _ = x.shape
    Kp = w1p.shape[0]
    tb, Bp = choose_batch_tile(B, block_b=block_b, min_steps=min_steps)
    xp = prepare_input(x, Bp, Kp)
    out = learning_group_padded(xp, w1p, b1p, w2p, b2p, tb)
    return out[:B, :output_size].astype(jnp.float32)


# --------------------------------------------------------------------------
# Parameter init (torch.nn.Linear-style), stored padded / bf16
# --------------------------------------------------------------------------
def init_params(key, input_size=945, L_node=315, output_size=19):
    k1, k2, k3, k4 = jax.random.split(key, 4)
    bound1 = 1.0 / jnp.sqrt(jnp.float32(input_size))
    bound2 = 1.0 / jnp.sqrt(jnp.float32(L_node))
    w1 = jax.random.uniform(k1, (input_size, L_node), jnp.float32, -bound1, bound1)
    b1 = jax.random.uniform(k2, (1, L_node), jnp.float32, -bound1, bound1)
    w2 = jax.random.uniform(k3, (L_node, output_size), jnp.float32, -bound2, bound2)
    b2 = jax.random.uniform(k4, (1, output_size), jnp.float32, -bound2, bound2)

    Kp = _round_up(input_size, LANE)
    Hp = _round_up(L_node, LANE)
    Np = _round_up(output_size, LANE)

    w1p = jnp.zeros((Kp, Hp), jnp.bfloat16).at[:input_size, :L_node].set(
        w1.astype(jnp.bfloat16))
    b1p = jnp.zeros((1, Hp), jnp.float32).at[:, :L_node].set(b1)
    w2p = jnp.zeros((Hp, Np), jnp.bfloat16).at[:L_node, :output_size].set(
        w2.astype(jnp.bfloat16))
    b2p = jnp.zeros((1, Np), jnp.float32).at[:, :output_size].set(b2)
    return w1p, b1p, w2p, b2p


# --------------------------------------------------------------------------
if __name__ == "__main__":
    key = jax.random.PRNGKey(0)
    kx, kp = jax.random.split(key)

    input_size, L_node, output_size = 945, 315, 19
    batch = 2

    x = jax.random.normal(kx, (batch, input_size), jnp.float32)
    w1p, b1p, w2p, b2p = init_params(kp, input_size, L_node, output_size)

    # Production-style path: producer keeps x in the padded bf16 layout (done
    # once here), kernel emits the padded bf16 slab, consumer slices/fuses it.
    Kp = w1p.shape[0]
    tb, Bp = choose_batch_tile(batch)
    xp = prepare_input(x, Bp, Kp)                       # producer-side, amortized
    out_padded = learning_group_padded(xp, w1p, b1p, w2p, b2p, tb)
    jax.block_until_ready(out_padded)
    out = out_padded[:batch, :output_size].astype(jnp.float32)   # consumer-side slice

    # Pure-JAX reference following the same bf16-storage / f32-accumulation /
    # bf16-output recipe as the kernel.
    hp = jax.lax.Precision.HIGHEST
    x_q = x.astype(jnp.bfloat16).astype(jnp.float32)
    w1f = w1p.astype(jnp.float32)[:input_size, :L_node]
    w2f = w2p.astype(jnp.float32)[:L_node, :output_size]
    h_ref = jnp.maximum(jnp.dot(x_q, w1f, precision=hp) + b1p[:, :L_node], 0.0)
    h_q = h_ref.astype(jnp.bfloat16).astype(jnp.float32)
    o_ref = jnp.dot(h_q, w2f, precision=hp) + b2p[:, :output_size]
    ref = o_ref.astype(jnp.bfloat16).astype(jnp.float32)

    assert out.shape == (batch, output_size)
    err = float(jnp.max(jnp.abs(out - ref)))
    assert jnp.allclose(out, ref, atol=3e-3, rtol=3e-3), err

    # Also exercise the PyTorch-parity convenience wrapper once.
    out2 = learning_group_forward(x, w1p, b1p, w2p, b2p, output_size=output_size)
    jax.block_until_ready(out2)
    assert out2.shape == (batch, output_size)

    # NOTE: bf16 storage of x/W1/W2 (and the bf16 hidden/output rounding)
    # deviates from the exact f32 PyTorch forward by ~1e-2 relative; use f32
    # weights if bit-level parity with the original model is required.
    print("KERNEL_OK")
</pallas_src>

<mosaic_0001>
module attributes {stable_mosaic.version = 11 : i64} {
  func.func @_mlp_kernel(%arg0: i32, %arg1: memref<8x1024xbf16, #tpu.memory_space<vmem>>, %arg2: memref<1024x384xbf16, #tpu.memory_space<vmem>>, %arg3: memref<1x384xf32, #tpu.memory_space<vmem>>, %arg4: memref<384x128xbf16, #tpu.memory_space<vmem>>, %arg5: memref<1x128xf32, #tpu.memory_space<vmem>>, %arg6: memref<8x128xbf16, #tpu.memory_space<vmem>>) attributes {dimension_semantics = [#tpu.dimension_semantics<parallel>], iteration_bounds = array<i64: 1>, scalar_prefetch = 0 : i64, scratch_operands = 0 : i64, tpu.core_type = #tpu.core_type<tc>, window_params = [{transform_indices = @transform_0, window_bounds = array<i64: 8, 1024>}, {pipeline_mode = #tpu.pipeline_mode<synchronous>, transform_indices = @transform_1, window_bounds = array<i64: 1024, 384>}, {pipeline_mode = #tpu.pipeline_mode<synchronous>, transform_indices = @transform_2, window_bounds = array<i64: 1, 384>}, {pipeline_mode = #tpu.pipeline_mode<synchronous>, transform_indices = @transform_3, window_bounds = array<i64: 384, 128>}, {pipeline_mode = #tpu.pipeline_mode<synchronous>, transform_indices = @transform_4, window_bounds = array<i64: 1, 128>}, {transform_indices = @transform_5, window_bounds = array<i64: 8, 128>}]} {
    %c0 = arith.constant 0 : index
    %c0_0 = arith.constant 0 : index
    %0 = vector.load %arg1[%c0, %c0_0] : memref<8x1024xbf16, #tpu.memory_space<vmem>>, vector<8x1024xbf16>
    %c0_1 = arith.constant 0 : index
    %c0_2 = arith.constant 0 : index
    %1 = vector.load %arg2[%c0_1, %c0_2] : memref<1024x384xbf16, #tpu.memory_space<vmem>>, vector<1024x384xbf16>
    %cst = arith.constant dense<0.000000e+00> : vector<8x384xf32>
    %2 = tpu.matmul %0, %1, %cst {dimension_numbers = #tpu.dot_dimension_numbers<[1], [0], [0], [1], [0, 0, 1, 1], [], []>} : vector<8x1024xbf16>, vector<1024x384xbf16>, vector<8x384xf32> -> vector<8x384xf32>
    %c0_3 = arith.constant 0 : index
    %c0_4 = arith.constant 0 : index
    %3 = vector.load %arg3[%c0_3, %c0_4] : memref<1x384xf32, #tpu.memory_space<vmem>>, vector<1x384xf32>
    %4 = vector.broadcast %3 : vector<1x384xf32> to vector<8x384xf32>
    %5 = arith.addf %2, %4 : vector<8x384xf32>
    %cst_5 = arith.constant 0.000000e+00 : f32
    %6 = vector.broadcast %cst_5 : f32 to vector<8x384xf32>
    %7 = arith.maximumf %5, %6 : vector<8x384xf32>
    %8 = arith.truncf %7 : vector<8x384xf32> to vector<8x384xbf16>
    %c0_6 = arith.constant 0 : index
    %c0_7 = arith.constant 0 : index
    %9 = vector.load %arg4[%c0_6, %c0_7] : memref<384x128xbf16, #tpu.memory_space<vmem>>, vector<384x128xbf16>
    %cst_8 = arith.constant dense<0.000000e+00> : vector<8x128xf32>
    %10 = tpu.matmul %8, %9, %cst_8 {dimension_numbers = #tpu.dot_dimension_numbers<[1], [0], [0], [1], [0, 0, 1, 1], [], []>} : vector<8x384xbf16>, vector<384x128xbf16>, vector<8x128xf32> -> vector<8x128xf32>
    %c0_9 = arith.constant 0 : index
    %c0_10 = arith.constant 0 : index
    %11 = vector.load %arg5[%c0_9, %c0_10] : memref<1x128xf32, #tpu.memory_space<vmem>>, vector<1x128xf32>
    %12 = vector.broadcast %11 : vector<1x128xf32> to vector<8x128xf32>
    %13 = arith.addf %10, %12 : vector<8x128xf32>
    %14 = arith.truncf %13 : vector<8x128xf32> to vector<8x128xbf16>
    %c0_11 = arith.constant 0 : index
    %c0_12 = arith.constant 0 : index
    %15 = vector.load %arg6[%c0_11, %c0_12] : memref<8x128xbf16, #tpu.memory_space<vmem>>, vector<8x128xbf16>
    tpu.vector_store %arg6[%c0_11, %c0_12], %14 {strides = array<i32>} : memref<8x128xbf16, #tpu.memory_space<vmem>>, vector<8x128xbf16>,
    return
  }
  func.func @transform_0(%arg0: i32) -> (i32, i32) {
    %c0_i32 = arith.constant 0 : i32
    %c0_i32_0 = arith.constant 0 : i32
    return %arg0, %c0_i32 : i32, i32
  }
  func.func @transform_1(%arg0: i32) -> (i32, i32) {
    %c0_i32 = arith.constant 0 : i32
    %c0_i32_0 = arith.constant 0 : i32
    %c0_i32_1 = arith.constant 0 : i32
    return %c0_i32, %c0_i32_0 : i32, i32
  }
  func.func @transform_2(%arg0: i32) -> (i32, i32) {
    %c0_i32 = arith.constant 0 : i32
    %c0_i32_0 = arith.constant 0 : i32
    %c0_i32_1 = arith.constant 0 : i32
    return %c0_i32, %c0_i32_0 : i32, i32
  }
  func.func @transform_3(%arg0: i32) -> (i32, i32) {
    %c0_i32 = arith.constant 0 : i32
    %c0_i32_0 = arith.constant 0 : i32
    %c0_i32_1 = arith.constant 0 : i32
    return %c0_i32, %c0_i32_0 : i32, i32
  }
  func.func @transform_4(%arg0: i32) -> (i32, i32) {
    %c0_i32 = arith.constant 0 : i32
    %c0_i32_0 = arith.constant 0 : i32
    %c0_i32_1 = arith.constant 0 : i32
    return %c0_i32, %c0_i32_0 : i32, i32
  }
  func.func @transform_5(%arg0: i32) -> (i32, i32) {
    %c0_i32 = arith.constant 0 : i32
    %c0_i32_0 = arith.constant 0 : i32
    return %arg0, %c0_i32 : i32, i32
  }
}

</mosaic_0001>

<llo_original>
// kernel: tpu_custom_call.1
$region0: #{tpu_custom_call.1}
  #allocation0 [shape = 'u32[]', space=smem, size = 0x4, offset = 0x4, fixed_abs, tag = 'smem constant byte address 0x4 - core index']
  #allocation1 [shape = 'u32[144,128]{1,0:T(1,128)}', space=vmem, size = 0x12000, scoped, tag = 'internal scratch']
  %s0 = inlined_call_operand.hbm [shape: bf16[8,1024], index: 0, kind: input, shape index: {}]
  %s1 = inlined_call_operand.hbm [shape: bf16[1024,384], index: 1, kind: input, shape index: {}]
  %s2 = inlined_call_operand.vmem [shape: f32[1,384], index: 2, kind: input, shape index: {}]
  %s3 = inlined_call_operand.hbm [shape: bf16[384,128], index: 3, kind: input, shape index: {}]
  %s4 = inlined_call_operand.vmem [shape: f32[1,128], index: 4, kind: input, shape index: {}]
  %s5 = inlined_call_operand.hbm [shape: bf16[8,128], index: 5, kind: output, shape index: {}]
  %s6 = sld [smem:[#allocation0]]
  $region42: #{tpu_custom_call.1} parent=0
    _
  %s8 = ssub.s32 1, %s6
  %s9 = scalar_select 0, %s8, %s6
  $region1: #{tpu_custom_call.1} parent=0
    #allocation2 [shape = 'u8[16384]{0}', space=vmem, size = 0x4000, scoped, tag = 'input window, operand 0, single buffered']
    #allocation3 [shape = 's32[1]{0}', space=sflag, size = 0x4, scoped, tag = 'scoped memory for tpu_custom_call.1']
    #allocation4 [shape = 's32[1]{0}', space=sflag, size = 0x4, scoped, tag = 'scoped memory for tpu_custom_call.1']
    #allocation5 [shape = 'u8[786432]{0}', space=vmem, size = 0xc0000, scoped, tag = 'input window, operand 1, single buffered']
    #allocation6 [shape = 's32[1]{0}', space=sflag, size = 0x4, scoped, tag = 'scoped memory for tpu_custom_call.1']
    #allocation7 [shape = 'u8[98304]{0}', space=vmem, size = 0x18000, scoped, tag = 'input window, operand 3, single buffered']
    #allocation8 [shape = 'u8[2048]{0}', space=vmem, size = 0x800, scoped, tag = 'output window, operand 0, single buffered']
    %10 = vsyncpa [#allocation3], 0
    %11 = vsyncpa [#allocation6], 0
    %12 = vsyncpa [#allocation4], 0
    // Predicated region
    $region2: #{tpu_custom_call.1} parent=1 // pred_check
      _
    $region3: #{tpu_custom_call.1} parent=1 // pred_check_branch
      %14 = sbr.rel (0) target = $region5
    $region4: #{tpu_custom_call.1} parent=1 // pred_region
      %s16 = ssub.s32 512, 512
      %17 = vsyncadd [#allocation3], %s16
      %s19 = sshll.u32 [#allocation2], 4
      %s20 = int_to_ptr.vmem [resolvable:$true] %s19
      %22 = dma.hbm_to_vmem [thread:$0]  %s0, 512, %s20, [#allocation3]
    $region5: #{tpu_custom_call.1} parent=1 // pred_fallthru
      _
    // Predicated region
    $region6: #{tpu_custom_call.1} parent=1 // pred_check
      _
    $region7: #{tpu_custom_call.1} parent=1 // pred_check_branch
      %24 = sbr.rel (0) target = $region9
    $region8: #{tpu_custom_call.1} parent=1 // pred_region
      %s26 = ssub.s32 24576, 24576
      %27 = vsyncadd [#allocation6], %s26
      %s28 = sshll.u32 [#allocation5], 4
      %s29 = int_to_ptr.vmem [resolvable:$true] %s28
      %34 = dma.hbm_to_vmem [thread:$0]  %s1, 24576, %s29, [#allocation6], 192, 192, 12
    $region9: #{tpu_custom_call.1} parent=1 // pred_fallthru
      _
    // Predicated region
    $region10: #{tpu_custom_call.1} parent=1 // pred_check
      _
    $region11: #{tpu_custom_call.1} parent=1 // pred_check_branch
      %36 = sbr.rel (0) target = $region13
    $region12: #{tpu_custom_call.1} parent=1 // pred_region
      _
    $region13: #{tpu_custom_call.1} parent=1 // pred_fallthru
      _
    // Predicated region
    $region14: #{tpu_custom_call.1} parent=1 // pred_check
      _
    $region15: #{tpu_custom_call.1} parent=1 // pred_check_branch
      %38 = sbr.rel (0) target = $region17
    $region16: #{tpu_custom_call.1} parent=1 // pred_region
      %s40 = ssub.s32 3072, 3072
      %41 = vsyncadd [#allocation6], %s40
      %s42 = sshll.u32 [#allocation7], 4
      %s43 = int_to_ptr.vmem [resolvable:$true] %s42
      %48 = dma.hbm_to_vmem [thread:$0]  %s3, 3072, %s43, [#allocation6], 64, 64, 4
    $region17: #{tpu_custom_call.1} parent=1 // pred_fallthru
      _
    // Predicated region
    $region18: #{tpu_custom_call.1} parent=1 // pred_check
      _
    $region19: #{tpu_custom_call.1} parent=1 // pred_check_branch
      %50 = sbr.rel (0) target = $region21
    $region20: #{tpu_custom_call.1} parent=1 // pred_region
      _
    $region21: #{tpu_custom_call.1} parent=1 // pred_fallthru
      _
    // Predicated region
    $region22: #{tpu_custom_call.1} parent=1 // pred_check
      _
    $region23: #{tpu_custom_call.1} parent=1 // pred_check_branch
      %52 = sbr.rel (0) target = $region25
    $region24: #{tpu_custom_call.1} parent=1 // pred_region
      %53 = dma.done [#allocation3], 512
    $region25: #{tpu_custom_call.1} parent=1 // pred_fallthru
      _
    // Predicated region
    $region26: #{tpu_custom_call.1} parent=1 // pred_check
      _
    $region27: #{tpu_custom_call.1} parent=1 // pred_check_branch
      %55 = sbr.rel (0) target = $region29
    $region28: #{tpu_custom_call.1} parent=1 // pred_region
      %56 = dma.done [#allocation6], 24576
    $region29: #{tpu_custom_call.1} parent=1 // pred_fallthru
      _
    // Predicated region
    $region30: #{tpu_custom_call.1} parent=1 // pred_check
      _
    $region31: #{tpu_custom_call.1} parent=1 // pred_check_branch
      %58 = sbr.rel (0) target = $region33
    $region32: #{tpu_custom_call.1} parent=1 // pred_region
      %59 = dma.done [#allocation6], 3072
    $region33: #{tpu_custom_call.1} parent=1 // pred_fallthru
      _
    %v61 = vld [vmem:[#allocation2] sm:$0xff]
    %v62 = vld [vmem:[#allocation2 + $0x8] sm:$0xff]
    %v63 = vld [vmem:[#allocation2 + $0x10] sm:$0xff]
    %v64 = vld [vmem:[#allocation2 + $0x18] sm:$0xff]
    %v65 = vld [vmem:[#allocation5] sm:$0xff]
    %v66 = vld [vmem:[#allocation5 + $0x8] sm:$0xf]
    %v67 = vld [vmem:[#allocation5 + $0xc] sm:$0xff]
    %v68 = vld [vmem:[#allocation5 + $0x14] sm:$0xf]
    %v69 = vld [vmem:[#allocation5 + $0x18] sm:$0xff]
    %v70 = vld [vmem:[#allocation5 + $0x20] sm:$0xf]
    %v71 = vld [vmem:[#allocation5 + $0x24] sm:$0xff]
    %v72 = vld [vmem:[#allocation5 + $0x2c] sm:$0xf]
    %v73 = vld [vmem:[#allocation5 + $0x30] sm:$0xff]
    %v74 = vld [vmem:[#allocation5 + $0x38] sm:$0xf]
    %v75 = vld [vmem:[#allocation5 + $0x3c] sm:$0xff]
    %v76 = vld [vmem:[#allocation5 + $0x44] sm:$0xf]
    %v77 = vld [vmem:[#allocation5 + $0x48] sm:$0xff]
    %v78 = vld [vmem:[#allocation5 + $0x50] sm:$0xf]
    %v79 = vld [vmem:[#allocation5 + $0x54] sm:$0xff]
    %v80 = vld [vmem:[#allocation5 + $0x5c] sm:$0xf]
    %v81 = vld [vmem:[#allocation5 + $0x60] sm:$0xff]
    %v82 = vld [vmem:[#allocation5 + $0x68] sm:$0xf]
    %v83 = vld [vmem:[#allocation5 + $0x6c] sm:$0xff]
    %v84 = vld [vmem:[#allocation5 + $0x74] sm:$0xf]
    %v85 = vld [vmem:[#allocation5 + $0x78] sm:$0xff]
    %v86 = vld [vmem:[#allocation5 + $0x80] sm:$0xf]
    %v87 = vld [vmem:[#allocation5 + $0x84] sm:$0xff]
    %v88 = vld [vmem:[#allocation5 + $0x8c] sm:$0xf]
    %v89 = vld [vmem:[#allocation5 + $0x90] sm:$0xff]
    %v90 = vld [vmem:[#allocation5 + $0x98] sm:$0xf]
    %v91 = vld [vmem:[#allocation5 + $0x9c] sm:$0xff]
    %v92 = vld [vmem:[#allocation5 + $0xa4] sm:$0xf]
    %v93 = vld [vmem:[#allocation5 + $0xa8] sm:$0xff]
    %v94 = vld [vmem:[#allocation5 + $0xb0] sm:$0xf]
    %v95 = vld [vmem:[#allocation5 + $0xb4] sm:$0xff]
    %v96 = vld [vmem:[#allocation5 + $0xbc] sm:$0xf]
    %v97 = vld [vmem:[#allocation5 + $0xc0] sm:$0xff]
    %v98 = vld [vmem:[#allocation5 + $0xc8] sm:$0xf]
    %v99 = vld [vmem:[#allocation5 + $0xcc] sm:$0xff]
    %v100 = vld [vmem:[#allocation5 + $0xd4] sm:$0xf]
    %v101 = vld [vmem:[#allocation5 + $0xd8] sm:$0xff]
    %v102 = vld [vmem:[#allocation5 + $0xe0] sm:$0xf]
    %v103 = vld [vmem:[#allocation5 + $0xe4] sm:$0xff]
    %v104 = vld [vmem:[#allocation5 + $0xec] sm:$0xf]
    %v105 = vld [vmem:[#allocation5 + $0xf0] sm:$0xff]
    %v106 = vld [vmem:[#allocation5 + $0xf8] sm:$0xf]
    %v107 = vld [vmem:[#allocation5 + $0xfc] sm:$0xff]
    %v108 = vld [vmem:[#allocation5 + $0x104] sm:$0xf]
    %v109 = vld [vmem:[#allocation5 + $0x108] sm:$0xff]
    %v110 = vld [vmem:[#allocation5 + $0x110] sm:$0xf]
    %v111 = vld [vmem:[#allocation5 + $0x114] sm:$0xff]
    %v112 = vld [vmem:[#allocation5 + $0x11c] sm:$0xf]
    %v113 = vld [vmem:[#allocation5 + $0x120] sm:$0xff]
    %v114 = vld [vmem:[#allocation5 + $0x128] sm:$0xf]
    %v115 = vld [vmem:[#allocation5 + $0x12c] sm:$0xff]
    %v116 = vld [vmem:[#allocation5 + $0x134] sm:$0xf]
    %v117 = vld [vmem:[#allocation5 + $0x138] sm:$0xff]
    %v118 = vld [vmem:[#allocation5 + $0x140] sm:$0xf]
    %v119 = vld [vmem:[#allocation5 + $0x144] sm:$0xff]
    %v120 = vld [vmem:[#allocation5 + $0x14c] sm:$0xf]
    %v121 = vld [vmem:[#allocation5 + $0x150] sm:$0xff]
    %v122 = vld [vmem:[#allocation5 + $0x158] sm:$0xf]
    %v123 = vld [vmem:[#allocation5 + $0x15c] sm:$0xff]
    %v124 = vld [vmem:[#allocation5 + $0x164] sm:$0xf]
    %v125 = vld [vmem:[#allocation5 + $0x168] sm:$0xff]
    %v126 = vld [vmem:[#allocation5 + $0x170] sm:$0xf]
    %v127 = vld [vmem:[#allocation5 + $0x174] sm:$0xff]
    %v128 = vld [vmem:[#allocation5 + $0x17c] sm:$0xf]
    %v129 = vld [vmem:[#allocation5 + $0x180] sm:$0xff]
    %v130 = vld [vmem:[#allocation5 + $0x188] sm:$0xf]
    %v131 = vld [vmem:[#allocation5 + $0x18c] sm:$0xff]
    %v132 = vld [vmem:[#allocation5 + $0x194] sm:$0xf]
    %v133 = vld [vmem:[#allocation5 + $0x198] sm:$0xff]
    %v134 = vld [vmem:[#allocation5 + $0x1a0] sm:$0xf]
    %v135 = vld [vmem:[#allocation5 + $0x1a4] sm:$0xff]
    %v136 = vld [vmem:[#allocation5 + $0x1ac] sm:$0xf]
    %v137 = vld [vmem:[#allocation5 + $0x1b0] sm:$0xff]
    %v138 = vld [vmem:[#allocation5 + $0x1b8] sm:$0xf]
    %v139 = vld [vmem:[#allocation5 + $0x1bc] sm:$0xff]
    %v140 = vld [vmem:[#allocation5 + $0x1c4] sm:$0xf]
    %v141 = vld [vmem:[#allocation5 + $0x1c8] sm:$0xff]
    %v142 = vld [vmem:[#allocation5 + $0x1d0] sm:$0xf]
    %v143 = vld [vmem:[#allocation5 + $0x1d4] sm:$0xff]
    %v144 = vld [vmem:[#allocation5 + $0x1dc] sm:$0xf]
    %v145 = vld [vmem:[#allocation5 + $0x1e0] sm:$0xff]
    %v146 = vld [vmem:[#allocation5 + $0x1e8] sm:$0xf]
    %v147 = vld [vmem:[#allocation5 + $0x1ec] sm:$0xff]
    %v148 = vld [vmem:[#allocation5 + $0x1f4] sm:$0xf]
    %v149 = vld [vmem:[#allocation5 + $0x1f8] sm:$0xff]
    %v150 = vld [vmem:[#allocation5 + $0x200] sm:$0xf]
    %v151 = vld [vmem:[#allocation5 + $0x204] sm:$0xff]
    %v152 = vld [vmem:[#allocation5 + $0x20c] sm:$0xf]
    %v153 = vld [vmem:[#allocation5 + $0x210] sm:$0xff]
    %v154 = vld [vmem:[#allocation5 + $0x218] sm:$0xf]
    %v155 = vld [vmem:[#allocation5 + $0x21c] sm:$0xff]
    %v156 = vld [vmem:[#allocation5 + $0x224] sm:$0xf]
    %v157 = vld [vmem:[#allocation5 + $0x228] sm:$0xff]
    %v158 = vld [vmem:[#allocation5 + $0x230] sm:$0xf]
    %v159 = vld [vmem:[#allocation5 + $0x234] sm:$0xff]
    %v160 = vld [vmem:[#allocation5 + $0x23c] sm:$0xf]
    %v161 = vld [vmem:[#allocation5 + $0x240] sm:$0xff]
    %v162 = vld [vmem:[#allocation5 + $0x248] sm:$0xf]
    %v163 = vld [vmem:[#allocation5 + $0x24c] sm:$0xff]
    %v164 = vld [vmem:[#allocation5 + $0x254] sm:$0xf]
    %v165 = vld [vmem:[#allocation5 + $0x258] sm:$0xff]
    %v166 = vld [vmem:[#allocation5 + $0x260] sm:$0xf]
    %v167 = vld [vmem:[#allocation5 + $0x264] sm:$0xff]
    %v168 = vld [vmem:[#allocation5 + $0x26c] sm:$0xf]
    %v169 = vld [vmem:[#allocation5 + $0x270] sm:$0xff]
    %v170 = vld [vmem:[#allocation5 + $0x278] sm:$0xf]
    %v171 = vld [vmem:[#allocation5 + $0x27c] sm:$0xff]
    %v172 = vld [vmem:[#allocation5 + $0x284] sm:$0xf]
    %v173 = vld [vmem:[#allocation5 + $0x288] sm:$0xff]
    %v174 = vld [vmem:[#allocation5 + $0x290] sm:$0xf]
    %v175 = vld [vmem:[#allocation5 + $0x294] sm:$0xff]
    %v176 = vld [vmem:[#allocation5 + $0x29c] sm:$0xf]
    %v177 = vld [vmem:[#allocation5 + $0x2a0] sm:$0xff]
    %v178 = vld [vmem:[#allocation5 + $0x2a8] sm:$0xf]
    %v179 = vld [vmem:[#allocation5 + $0x2ac] sm:$0xff]
    %v180 = vld [vmem:[#allocation5 + $0x2b4] sm:$0xf]
    %v181 = vld [vmem:[#allocation5 + $0x2b8] sm:$0xff]
    %v182 = vld [vmem:[#allocation5 + $0x2c0] sm:$0xf]
    %v183 = vld [vmem:[#allocation5 + $0x2c4] sm:$0xff]
    %v184 = vld [vmem:[#allocation5 + $0x2cc] sm:$0xf]
    %v185 = vld [vmem:[#allocation5 + $0x2d0] sm:$0xff]
    %v186 = vld [vmem:[#allocation5 + $0x2d8] sm:$0xf]
    %v187 = vld [vmem:[#allocation5 + $0x2dc] sm:$0xff]
    %v188 = vld [vmem:[#allocation5 + $0x2e4] sm:$0xf]
    %v189 = vld [vmem:[#allocation5 + $0x2e8] sm:$0xff]
    %v190 = vld [vmem:[#allocation5 + $0x2f0] sm:$0xf]
    %v191 = vld [vmem:[#allocation5 + $0x2f4] sm:$0xff]
    %v192 = vld [vmem:[#allocation5 + $0x2fc] sm:$0xf]
    %v193 = vld [vmem:[#allocation5 + $0x300] sm:$0xff]
    %v194 = vld [vmem:[#allocation5 + $0x308] sm:$0xf]
    %v195 = vld [vmem:[#allocation5 + $0x30c] sm:$0xff]
    %v196 = vld [vmem:[#allocation5 + $0x314] sm:$0xf]
    %v197 = vld [vmem:[#allocation5 + $0x318] sm:$0xff]
    %v198 = vld [vmem:[#allocation5 + $0x320] sm:$0xf]
    %v199 = vld [vmem:[#allocation5 + $0x324] sm:$0xff]
    %v200 = vld [vmem:[#allocation5 + $0x32c] sm:$0xf]
    %v201 = vld [vmem:[#allocation5 + $0x330] sm:$0xff]
    %v202 = vld [vmem:[#allocation5 + $0x338] sm:$0xf]
    %v203 = vld [vmem:[#allocation5 + $0x33c] sm:$0xff]
    %v204 = vld [vmem:[#allocation5 + $0x344] sm:$0xf]
    %v205 = vld [vmem:[#allocation5 + $0x348] sm:$0xff]
    %v206 = vld [vmem:[#allocation5 + $0x350] sm:$0xf]
    %v207 = vld [vmem:[#allocation5 + $0x354] sm:$0xff]
    %v208 = vld [vmem:[#allocation5 + $0x35c] sm:$0xf]
    %v209 = vld [vmem:[#allocation5 + $0x360] sm:$0xff]
    %v210 = vld [vmem:[#allocation5 + $0x368] sm:$0xf]
    %v211 = vld [vmem:[#allocation5 + $0x36c] sm:$0xff]
    %v212 = vld [vmem:[#allocation5 + $0x374] sm:$0xf]
    %v213 = vld [vmem:[#allocation5 + $0x378] sm:$0xff]
    %v214 = vld [vmem:[#allocation5 + $0x380] sm:$0xf]
    %v215 = vld [vmem:[#allocation5 + $0x384] sm:$0xff]
    %v216 = vld [vmem:[#allocation5 + $0x38c] sm:$0xf]
    %v217 = vld [vmem:[#allocation5 + $0x390] sm:$0xff]
    %v218 = vld [vmem:[#allocation5 + $0x398] sm:$0xf]
    %v219 = vld [vmem:[#allocation5 + $0x39c] sm:$0xff]
    %v220 = vld [vmem:[#allocation5 + $0x3a4] sm:$0xf]
    %v221 = vld [vmem:[#allocation5 + $0x3a8] sm:$0xff]
    %v222 = vld [vmem:[#allocation5 + $0x3b0] sm:$0xf]
    %v223 = vld [vmem:[#allocation5 + $0x3b4] sm:$0xff]
    %v224 = vld [vmem:[#allocation5 + $0x3bc] sm:$0xf]
    %v225 = vld [vmem:[#allocation5 + $0x3c0] sm:$0xff]
    %v226 = vld [vmem:[#allocation5 + $0x3c8] sm:$0xf]
    %v227 = vld [vmem:[#allocation5 + $0x3cc] sm:$0xff]
    %v228 = vld [vmem:[#allocation5 + $0x3d4] sm:$0xf]
    %v229 = vld [vmem:[#allocation5 + $0x3d8] sm:$0xff]
    %v230 = vld [vmem:[#allocation5 + $0x3e0] sm:$0xf]
    %v231 = vld [vmem:[#allocation5 + $0x3e4] sm:$0xff]
    %v232 = vld [vmem:[#allocation5 + $0x3ec] sm:$0xf]
    %v233 = vld [vmem:[#allocation5 + $0x3f0] sm:$0xff]
    %v234 = vld [vmem:[#allocation5 + $0x3f8] sm:$0xf]
    %v235 = vld [vmem:[#allocation5 + $0x3fc] sm:$0xff]
    %v236 = vld [vmem:[#allocation5 + $0x404] sm:$0xf]
    %v237 = vld [vmem:[#allocation5 + $0x408] sm:$0xff]
    %v238 = vld [vmem:[#allocation5 + $0x410] sm:$0xf]
    %v239 = vld [vmem:[#allocation5 + $0x414] sm:$0xff]
    %v240 = vld [vmem:[#allocation5 + $0x41c] sm:$0xf]
    %v241 = vld [vmem:[#allocation5 + $0x420] sm:$0xff]
    %v242 = vld [vmem:[#allocation5 + $0x428] sm:$0xf]
    %v243 = vld [vmem:[#allocation5 + $0x42c] sm:$0xff]
    %v244 = vld [vmem:[#allocation5 + $0x434] sm:$0xf]
    %v245 = vld [vmem:[#allocation5 + $0x438] sm:$0xff]
    %v246 = vld [vmem:[#allocation5 + $0x440] sm:$0xf]
    %v247 = vld [vmem:[#allocation5 + $0x444] sm:$0xff]
    %v248 = vld [vmem:[#allocation5 + $0x44c] sm:$0xf]
    %v249 = vld [vmem:[#allocation5 + $0x450] sm:$0xff]
    %v250 = vld [vmem:[#allocation5 + $0x458] sm:$0xf]
    %v251 = vld [vmem:[#allocation5 + $0x45c] sm:$0xff]
    %v252 = vld [vmem:[#allocation5 + $0x464] sm:$0xf]
    %v253 = vld [vmem:[#allocation5 + $0x468] sm:$0xff]
    %v254 = vld [vmem:[#allocation5 + $0x470] sm:$0xf]
    %v255 = vld [vmem:[#allocation5 + $0x474] sm:$0xff]
    %v256 = vld [vmem:[#allocation5 + $0x47c] sm:$0xf]
    %v257 = vld [vmem:[#allocation5 + $0x480] sm:$0xff]
    %v258 = vld [vmem:[#allocation5 + $0x488] sm:$0xf]
    %v259 = vld [vmem:[#allocation5 + $0x48c] sm:$0xff]
    %v260 = vld [vmem:[#allocation5 + $0x494] sm:$0xf]
    %v261 = vld [vmem:[#allocation5 + $0x498] sm:$0xff]
    %v262 = vld [vmem:[#allocation5 + $0x4a0] sm:$0xf]
    %v263 = vld [vmem:[#allocation5 + $0x4a4] sm:$0xff]
    %v264 = vld [vmem:[#allocation5 + $0x4ac] sm:$0xf]
    %v265 = vld [vmem:[#allocation5 + $0x4b0] sm:$0xff]
    %v266 = vld [vmem:[#allocation5 + $0x4b8] sm:$0xf]
    %v267 = vld [vmem:[#allocation5 + $0x4bc] sm:$0xff]
    %v268 = vld [vmem:[#allocation5 + $0x4c4] sm:$0xf]
    %v269 = vld [vmem:[#allocation5 + $0x4c8] sm:$0xff]
    %v270 = vld [vmem:[#allocation5 + $0x4d0] sm:$0xf]
    %v271 = vld [vmem:[#allocation5 + $0x4d4] sm:$0xff]
    %v272 = vld [vmem:[#allocation5 + $0x4dc] sm:$0xf]
    %v273 = vld [vmem:[#allocation5 + $0x4e0] sm:$0xff]
    %v274 = vld [vmem:[#allocation5 + $0x4e8] sm:$0xf]
    %v275 = vld [vmem:[#allocation5 + $0x4ec] sm:$0xff]
    %v276 = vld [vmem:[#allocation5 + $0x4f4] sm:$0xf]
    %v277 = vld [vmem:[#allocation5 + $0x4f8] sm:$0xff]
    %v278 = vld [vmem:[#allocation5 + $0x500] sm:$0xf]
    %v279 = vld [vmem:[#allocation5 + $0x504] sm:$0xff]
    %v280 = vld [vmem:[#allocation5 + $0x50c] sm:$0xf]
    %v281 = vld [vmem:[#allocation5 + $0x510] sm:$0xff]
    %v282 = vld [vmem:[#allocation5 + $0x518] sm:$0xf]
    %v283 = vld [vmem:[#allocation5 + $0x51c] sm:$0xff]
    %v284 = vld [vmem:[#allocation5 + $0x524] sm:$0xf]
    %v285 = vld [vmem:[#allocation5 + $0x528] sm:$0xff]
    %v286 = vld [vmem:[#allocation5 + $0x530] sm:$0xf]
    %v287 = vld [vmem:[#allocation5 + $0x534] sm:$0xff]
    %v288 = vld [vmem:[#allocation5 + $0x53c] sm:$0xf]
    %v289 = vld [vmem:[#allocation5 + $0x540] sm:$0xff]
    %v290 = vld [vmem:[#allocation5 + $0x548] sm:$0xf]
    %v291 = vld [vmem:[#allocation5 + $0x54c] sm:$0xff]
    %v292 = vld [vmem:[#allocation5 + $0x554] sm:$0xf]
    %v293 = vld [vmem:[#allocation5 + $0x558] sm:$0xff]
    %v294 = vld [vmem:[#allocation5 + $0x560] sm:$0xf]
    %v295 = vld [vmem:[#allocation5 + $0x564] sm:$0xff]
    %v296 = vld [vmem:[#allocation5 + $0x56c] sm:$0xf]
    %v297 = vld [vmem:[#allocation5 + $0x570] sm:$0xff]
    %v298 = vld [vmem:[#allocation5 + $0x578] sm:$0xf]
    %v299 = vld [vmem:[#allocation5 + $0x57c] sm:$0xff]
    %v300 = vld [vmem:[#allocation5 + $0x584] sm:$0xf]
    %v301 = vld [vmem:[#allocation5 + $0x588] sm:$0xff]
    %v302 = vld [vmem:[#allocation5 + $0x590] sm:$0xf]
    %v303 = vld [vmem:[#allocation5 + $0x594] sm:$0xff]
    %v304 = vld [vmem:[#allocation5 + $0x59c] sm:$0xf]
    %v305 = vld [vmem:[#allocation5 + $0x5a0] sm:$0xff]
    %v306 = vld [vmem:[#allocation5 + $0x5a8] sm:$0xf]
    %v307 = vld [vmem:[#allocation5 + $0x5ac] sm:$0xff]
    %v308 = vld [vmem:[#allocation5 + $0x5b4] sm:$0xf]
    %v309 = vld [vmem:[#allocation5 + $0x5b8] sm:$0xff]
    %v310 = vld [vmem:[#allocation5 + $0x5c0] sm:$0xf]
    %v311 = vld [vmem:[#allocation5 + $0x5c4] sm:$0xff]
    %v312 = vld [vmem:[#allocation5 + $0x5cc] sm:$0xf]
    %v313 = vld [vmem:[#allocation5 + $0x5d0] sm:$0xff]
    %v314 = vld [vmem:[#allocation5 + $0x5d8] sm:$0xf]
    %v315 = vld [vmem:[#allocation5 + $0x5dc] sm:$0xff]
    %v316 = vld [vmem:[#allocation5 + $0x5e4] sm:$0xf]
    %v317 = vld [vmem:[#allocation5 + $0x5e8] sm:$0xff]
    %v318 = vld [vmem:[#allocation5 + $0x5f0] sm:$0xf]
    %v319 = vld [vmem:[#allocation5 + $0x5f4] sm:$0xff]
    %v320 = vld [vmem:[#allocation5 + $0x5fc] sm:$0xf]
    %v321 = vld [vmem:[%s2] sm:$0x7]
    %v323 = vlaneseq
    %v324 = vshrl.u32 %v323, 7
    %v325 = vsub.s32 0, %v324
    %v326 = vrot.slane %v321, %v325
    %v327 = vlaneseq
    %v328 = vshrl.u32 %v327, 7
    %v329 = vsub.s32 1, %v328
    %v330 = vrot.slane %v321, %v329
    %v331 = vlaneseq
    %v332 = vshrl.u32 %v331, 7
    %v333 = vsub.s32 2, %v332
    %v334 = vrot.slane %v321, %v333
    %v342 = vunpack.c.l.b16 %v61
    %v343 = vunpack.c.h.b16 %v61
    %v344 = vunpack.c.l.b16 %v62
    %v345 = vunpack.c.h.b16 %v62
    %v346 = vunpack.c.l.b16 %v63
    %v347 = vunpack.c.h.b16 %v63
    %v348 = vunpack.c.l.b16 %v64
    %v349 = vunpack.c.h.b16 %v64
    %v350 = vpack.c.b16 %v342, %v342
    %v351 = vpack.c.b16 %v343, %v343
    %v352 = vpack.c.b16 %v344, %v344
    %v353 = vpack.c.b16 %v345, %v345
    %v354 = vpack.c.b16 %v346, %v346
    %v355 = vpack.c.b16 %v347, %v347
    %v356 = vpack.c.b16 %v348, %v348
    %v357 = vpack.c.b16 %v349, %v349
    %v622 = vunpack.c.l.b16 %v65
    %v623 = vunpack.c.h.b16 %v65
    %v624 = vunpack.c.l.b16 %v66
    %v625 = vunpack.c.l.b16 %v67
    %v626 = vunpack.c.h.b16 %v67
    %v627 = vunpack.c.l.b16 %v68
    %v628 = vunpack.c.l.b16 %v69
    %v629 = vunpack.c.h.b16 %v69
    %v630 = vunpack.c.l.b16 %v70
    %v631 = vunpack.c.l.b16 %v71
    %v632 = vunpack.c.h.b16 %v71
    %v633 = vunpack.c.l.b16 %v72
    %v634 = vunpack.c.l.b16 %v73
    %v635 = vunpack.c.h.b16 %v73
    %v636 = vunpack.c.l.b16 %v74
    %v637 = vunpack.c.l.b16 %v75
    %v638 = vunpack.c.h.b16 %v75
    %v639 = vunpack.c.l.b16 %v76
    %v640 = vunpack.c.l.b16 %v77
    %v641 = vunpack.c.h.b16 %v77
    %v642 = vunpack.c.l.b16 %v78
    %v643 = vunpack.c.l.b16 %v79
    %v644 = vunpack.c.h.b16 %v79
    %v645 = vunpack.c.l.b16 %v80
    %v646 = vunpack.c.l.b16 %v81
    %v647 = vunpack.c.h.b16 %v81
    %v648 = vunpack.c.l.b16 %v82
    %v649 = vunpack.c.l.b16 %v83
    %v650 = vunpack.c.h.b16 %v83
    %v651 = vunpack.c.l.b16 %v84
    %v652 = vunpack.c.l.b16 %v85
    %v653 = vunpack.c.h.b16 %v85
    %v654 = vunpack.c.l.b16 %v86
    %v655 = vunpack.c.l.b16 %v87
    %v656 = vunpack.c.h.b16 %v87
    %v657 = vunpack.c.l.b16 %v88
    %v658 = vunpack.c.l.b16 %v89
    %v659 = vunpack.c.h.b16 %v89
    %v660 = vunpack.c.l.b16 %v90
    %v661 = vunpack.c.l.b16 %v91
    %v662 = vunpack.c.h.b16 %v91
    %v663 = vunpack.c.l.b16 %v92
    %v664 = vunpack.c.l.b16 %v93
    %v665 = vunpack.c.h.b16 %v93
    %v666 = vunpack.c.l.b16 %v94
    %v667 = vunpack.c.l.b16 %v95
    %v668 = vunpack.c.h.b16 %v95
    %v669 = vunpack.c.l.b16 %v96
    %v670 = vunpack.c.l.b16 %v97
    %v671 = vunpack.c.h.b16 %v97
    %v672 = vunpack.c.l.b16 %v98
    %v673 = vunpack.c.l.b16 %v99
    %v674 = vunpack.c.h.b16 %v99
    %v675 = vunpack.c.l.b16 %v100
    %v676 = vunpack.c.l.b16 %v101
    %v677 = vunpack.c.h.b16 %v101
    %v678 = vunpack.c.l.b16 %v102
    %v679 = vunpack.c.l.b16 %v103
    %v680 = vunpack.c.h.b16 %v103
    %v681 = vunpack.c.l.b16 %v104
    %v682 = vunpack.c.l.b16 %v105
    %v683 = vunpack.c.h.b16 %v105
    %v684 = vunpack.c.l.b16 %v106
    %v685 = vunpack.c.l.b16 %v107
    %v686 = vunpack.c.h.b16 %v107
    %v687 = vunpack.c.l.b16 %v108
    %v688 = vunpack.c.l.b16 %v109
    %v689 = vunpack.c.h.b16 %v109
    %v690 = vunpack.c.l.b16 %v110
    %v691 = vunpack.c.l.b16 %v111
    %v692 = vunpack.c.h.b16 %v111
    %v693 = vunpack.c.l.b16 %v112
    %v694 = vunpack.c.l.b16 %v113
    %v695 = vunpack.c.h.b16 %v113
    %v696 = vunpack.c.l.b16 %v114
    %v697 = vunpack.c.l.b16 %v115
    %v698 = vunpack.c.h.b16 %v115
    %v699 = vunpack.c.l.b16 %v116
    %v700 = vunpack.c.l.b16 %v117
    %v701 = vunpack.c.h.b16 %v117
    %v702 = vunpack.c.l.b16 %v118
    %v703 = vunpack.c.l.b16 %v119
    %v704 = vunpack.c.h.b16 %v119
    %v705 = vunpack.c.l.b16 %v120
    %v706 = vunpack.c.l.b16 %v121
    %v707 = vunpack.c.h.b16 %v121
    %v708 = vunpack.c.l.b16 %v122
    %v709 = vunpack.c.l.b16 %v123
    %v710 = vunpack.c.h.b16 %v123
    %v711 = vunpack.c.l.b16 %v124
    %v712 = vunpack.c.l.b16 %v125
    %v713 = vunpack.c.h.b16 %v125
    %v714 = vunpack.c.l.b16 %v126
    %v715 = vunpack.c.l.b16 %v127
    %v716 = vunpack.c.h.b16 %v127
    %v717 = vunpack.c.l.b16 %v128
    %v718 = vunpack.c.l.b16 %v129
    %v719 = vunpack.c.h.b16 %v129
    %v720 = vunpack.c.l.b16 %v130
    %v721 = vunpack.c.l.b16 %v131
    %v722 = vunpack.c.h.b16 %v131
    %v723 = vunpack.c.l.b16 %v132
    %v724 = vunpack.c.l.b16 %v133
    %v725 = vunpack.c.h.b16 %v133
    %v726 = vunpack.c.l.b16 %v134
    %v727 = vunpack.c.l.b16 %v135
    %v728 = vunpack.c.h.b16 %v135
    %v729 = vunpack.c.l.b16 %v136
    %v730 = vunpack.c.l.b16 %v137
    %v731 = vunpack.c.h.b16 %v137
    %v732 = vunpack.c.l.b16 %v138
    %v733 = vunpack.c.l.b16 %v139
    %v734 = vunpack.c.h.b16 %v139
    %v735 = vunpack.c.l.b16 %v140
    %v736 = vunpack.c.l.b16 %v141
    %v737 = vunpack.c.h.b16 %v141
    %v738 = vunpack.c.l.b16 %v142
    %v739 = vunpack.c.l.b16 %v143
    %v740 = vunpack.c.h.b16 %v143
    %v741 = vunpack.c.l.b16 %v144
    %v742 = vunpack.c.l.b16 %v145
    %v743 = vunpack.c.h.b16 %v145
    %v744 = vunpack.c.l.b16 %v146
    %v745 = vunpack.c.l.b16 %v147
    %v746 = vunpack.c.h.b16 %v147
    %v747 = vunpack.c.l.b16 %v148
    %v748 = vunpack.c.l.b16 %v149
    %v749 = vunpack.c.h.b16 %v149
    %v750 = vunpack.c.l.b16 %v150
    %v751 = vunpack.c.l.b16 %v151
    %v752 = vunpack.c.h.b16 %v151
    %v753 = vunpack.c.l.b16 %v152
    %v754 = vunpack.c.l.b16 %v153
    %v755 = vunpack.c.h.b16 %v153
    %v756 = vunpack.c.l.b16 %v154
    %v757 = vunpack.c.l.b16 %v155
    %v758 = vunpack.c.h.b16 %v155
    %v759 = vunpack.c.l.b16 %v156
    %v760 = vunpack.c.l.b16 %v157
    %v761 = vunpack.c.h.b16 %v157
    %v762 = vunpack.c.l.b16 %v158
    %v763 = vunpack.c.l.b16 %v159
    %v764 = vunpack.c.h.b16 %v159
    %v765 = vunpack.c.l.b16 %v160
    %v766 = vunpack.c.l.b16 %v161
    %v767 = vunpack.c.h.b16 %v161
    %v768 = vunpack.c.l.b16 %v162
    %v769 = vunpack.c.l.b16 %v163
    %v770 = vunpack.c.h.b16 %v163
    %v771 = vunpack.c.l.b16 %v164
    %v772 = vunpack.c.l.b16 %v165
    %v773 = vunpack.c.h.b16 %v165
    %v774 = vunpack.c.l.b16 %v166
    %v775 = vunpack.c.l.b16 %v167
    %v776 = vunpack.c.h.b16 %v167
    %v777 = vunpack.c.l.b16 %v168
    %v778 = vunpack.c.l.b16 %v169
    %v779 = vunpack.c.h.b16 %v169
    %v780 = vunpack.c.l.b16 %v170
    %v781 = vunpack.c.l.b16 %v171
    %v782 = vunpack.c.h.b16 %v171
    %v783 = vunpack.c.l.b16 %v172
    %v784 = vunpack.c.l.b16 %v173
    %v785 = vunpack.c.h.b16 %v173
    %v786 = vunpack.c.l.b16 %v174
    %v787 = vunpack.c.l.b16 %v175
    %v788 = vunpack.c.h.b16 %v175
    %v789 = vunpack.c.l.b16 %v176
    %v790 = vunpack.c.l.b16 %v177
    %v791 = vunpack.c.h.b16 %v177
    %v792 = vunpack.c.l.b16 %v178
    %v793 = vunpack.c.l.b16 %v179
    %v794 = vunpack.c.h.b16 %v179
    %v795 = vunpack.c.l.b16 %v180
    %v796 = vunpack.c.l.b16 %v181
    %v797 = vunpack.c.h.b16 %v181
    %v798 = vunpack.c.l.b16 %v182
    %v799 = vunpack.c.l.b16 %v183
    %v800 = vunpack.c.h.b16 %v183
    %v801 = vunpack.c.l.b16 %v184
    %v802 = vunpack.c.l.b16 %v185
    %v803 = vunpack.c.h.b16 %v185
    %v804 = vunpack.c.l.b16 %v186
    %v805 = vunpack.c.l.b16 %v187
    %v806 = vunpack.c.h.b16 %v187
    %v807 = vunpack.c.l.b16 %v188
    %v808 = vunpack.c.l.b16 %v189
    %v809 = vunpack.c.h.b16 %v189
    %v810 = vunpack.c.l.b16 %v190
    %v811 = vunpack.c.l.b16 %v191
    %v812 = vunpack.c.h.b16 %v191
    %v813 = vunpack.c.l.b16 %v192
    %v814 = vunpack.c.l.b16 %v193
    %v815 = vunpack.c.h.b16 %v193
    %v816 = vunpack.c.l.b16 %v194
    %v817 = vunpack.c.l.b16 %v195
    %v818 = vunpack.c.h.b16 %v195
    %v819 = vunpack.c.l.b16 %v196
    %v820 = vunpack.c.l.b16 %v197
    %v821 = vunpack.c.h.b16 %v197
    %v822 = vunpack.c.l.b16 %v198
    %v823 = vunpack.c.l.b16 %v199
    %v824 = vunpack.c.h.b16 %v199
    %v825 = vunpack.c.l.b16 %v200
    %v826 = vunpack.c.l.b16 %v201
    %v827 = vunpack.c.h.b16 %v201
    %v828 = vunpack.c.l.b16 %v202
    %v829 = vunpack.c.l.b16 %v203
    %v830 = vunpack.c.h.b16 %v203
    %v831 = vunpack.c.l.b16 %v204
    %v832 = vunpack.c.l.b16 %v205
    %v833 = vunpack.c.h.b16 %v205
    %v834 = vunpack.c.l.b16 %v206
    %v835 = vunpack.c.l.b16 %v207
    %v836 = vunpack.c.h.b16 %v207
    %v837 = vunpack.c.l.b16 %v208
    %v838 = vunpack.c.l.b16 %v209
    %v839 = vunpack.c.h.b16 %v209
    %v840 = vunpack.c.l.b16 %v210
    %v841 = vunpack.c.l.b16 %v211
    %v842 = vunpack.c.h.b16 %v211
    %v843 = vunpack.c.l.b16 %v212
    %v844 = vunpack.c.l.b16 %v213
    %v845 = vunpack.c.h.b16 %v213
    %v846 = vunpack.c.l.b16 %v214
    %v847 = vunpack.c.l.b16 %v215
    %v848 = vunpack.c.h.b16 %v215
    %v849 = vunpack.c.l.b16 %v216
    %v850 = vunpack.c.l.b16 %v217
    %v851 = vunpack.c.h.b16 %v217
    %v852 = vunpack.c.l.b16 %v218
    %v853 = vunpack.c.l.b16 %v219
    %v854 = vunpack.c.h.b16 %v219
    %v855 = vunpack.c.l.b16 %v220
    %v856 = vunpack.c.l.b16 %v221
    %v857 = vunpack.c.h.b16 %v221
    %v858 = vunpack.c.l.b16 %v222
    %v859 = vunpack.c.l.b16 %v223
    %v860 = vunpack.c.h.b16 %v223
    %v861 = vunpack.c.l.b16 %v224
    %v862 = vunpack.c.l.b16 %v225
    %v863 = vunpack.c.h.b16 %v225
    %v864 = vunpack.c.l.b16 %v226
    %v865 = vunpack.c.l.b16 %v227
    %v866 = vunpack.c.h.b16 %v227
    %v867 = vunpack.c.l.b16 %v228
    %v868 = vunpack.c.l.b16 %v229
    %v869 = vunpack.c.h.b16 %v229
    %v870 = vunpack.c.l.b16 %v230
    %v871 = vunpack.c.l.b16 %v231
    %v872 = vunpack.c.h.b16 %v231
    %v873 = vunpack.c.l.b16 %v232
    %v874 = vunpack.c.l.b16 %v233
    %v875 = vunpack.c.h.b16 %v233
    %v876 = vunpack.c.l.b16 %v234
    %v877 = vunpack.c.l.b16 %v235
    %v878 = vunpack.c.h.b16 %v235
    %v879 = vunpack.c.l.b16 %v236
    %v880 = vunpack.c.l.b16 %v237
    %v881 = vunpack.c.h.b16 %v237
    %v882 = vunpack.c.l.b16 %v238
    %v883 = vunpack.c.l.b16 %v239
    %v884 = vunpack.c.h.b16 %v239
    %v885 = vunpack.c.l.b16 %v240
    %v886 = vunpack.c.l.b16 %v241
    %v887 = vunpack.c.h.b16 %v241
    %v888 = vunpack.c.l.b16 %v242
    %v889 = vunpack.c.l.b16 %v243
    %v890 = vunpack.c.h.b16 %v243
    %v891 = vunpack.c.l.b16 %v244
    %v892 = vunpack.c.l.b16 %v245
    %v893 = vunpack.c.h.b16 %v245
    %v894 = vunpack.c.l.b16 %v246
    %v895 = vunpack.c.l.b16 %v247
    %v896 = vunpack.c.h.b16 %v247
    %v897 = vunpack.c.l.b16 %v248
    %v898 = vunpack.c.l.b16 %v249
    %v899 = vunpack.c.h.b16 %v249
    %v900 = vunpack.c.l.b16 %v250
    %v901 = vunpack.c.l.b16 %v251
    %v902 = vunpack.c.h.b16 %v251
    %v903 = vunpack.c.l.b16 %v252
    %v904 = vunpack.c.l.b16 %v253
    %v905 = vunpack.c.h.b16 %v253
    %v906 = vunpack.c.l.b16 %v254
    %v907 = vunpack.c.l.b16 %v255
    %v908 = vunpack.c.h.b16 %v255
    %v909 = vunpack.c.l.b16 %v256
    %v910 = vunpack.c.l.b16 %v257
    %v911 = vunpack.c.h.b16 %v257
    %v912 = vunpack.c.l.b16 %v258
    %v913 = vunpack.c.l.b16 %v259
    %v914 = vunpack.c.h.b16 %v259
    %v915 = vunpack.c.l.b16 %v260
    %v916 = vunpack.c.l.b16 %v261
    %v917 = vunpack.c.h.b16 %v261
    %v918 = vunpack.c.l.b16 %v262
    %v919 = vunpack.c.l.b16 %v263
    %v920 = vunpack.c.h.b16 %v263
    %v921 = vunpack.c.l.b16 %v264
    %v922 = vunpack.c.l.b16 %v265
    %v923 = vunpack.c.h.b16 %v265
    %v924 = vunpack.c.l.b16 %v266
    %v925 = vunpack.c.l.b16 %v267
    %v926 = vunpack.c.h.b16 %v267
    %v927 = vunpack.c.l.b16 %v268
    %v928 = vunpack.c.l.b16 %v269
    %v929 = vunpack.c.h.b16 %v269
    %v930 = vunpack.c.l.b16 %v270
    %v931 = vunpack.c.l.b16 %v271
    %v932 = vunpack.c.h.b16 %v271
    %v933 = vunpack.c.l.b16 %v272
    %v934 = vunpack.c.l.b16 %v273
    %v935 = vunpack.c.h.b16 %v273
    %v936 = vunpack.c.l.b16 %v274
    %v937 = vunpack.c.l.b16 %v275
    %v938 = vunpack.c.h.b16 %v275
    %v939 = vunpack.c.l.b16 %v276
    %v940 = vunpack.c.l.b16 %v277
    %v941 = vunpack.c.h.b16 %v277
    %v942 = vunpack.c.l.b16 %v278
    %v943 = vunpack.c.l.b16 %v279
    %v944 = vunpack.c.h.b16 %v279
    %v945 = vunpack.c.l.b16 %v280
    %v946 = vunpack.c.l.b16 %v281
    %v947 = vunpack.c.h.b16 %v281
    %v948 = vunpack.c.l.b16 %v282
    %v949 = vunpack.c.l.b16 %v283
    %v950 = vunpack.c.h.b16 %v283
    %v951 = vunpack.c.l.b16 %v284
    %v952 = vunpack.c.l.b16 %v285
    %v953 = vunpack.c.h.b16 %v285
    %v954 = vunpack.c.l.b16 %v286
    %v955 = vunpack.c.l.b16 %v287
    %v956 = vunpack.c.h.b16 %v287
    %v957 = vunpack.c.l.b16 %v288
    %v958 = vunpack.c.l.b16 %v289
    %v959 = vunpack.c.h.b16 %v289
    %v960 = vunpack.c.l.b16 %v290
    %v961 = vunpack.c.l.b16 %v291
    %v962 = vunpack.c.h.b16 %v291
    %v963 = vunpack.c.l.b16 %v292
    %v964 = vunpack.c.l.b16 %v293
    %v965 = vunpack.c.h.b16 %v293
    %v966 = vunpack.c.l.b16 %v294
    %v967 = vunpack.c.l.b16 %v295
    %v968 = vunpack.c.h.b16 %v295
    %v969 = vunpack.c.l.b16 %v296
    %v970 = vunpack.c.l.b16 %v297
    %v971 = vunpack.c.h.b16 %v297
    %v972 = vunpack.c.l.b16 %v298
    %v973 = vunpack.c.l.b16 %v299
    %v974 = vunpack.c.h.b16 %v299
    %v975 = vunpack.c.l.b16 %v300
    %v976 = vunpack.c.l.b16 %v301
    %v977 = vunpack.c.h.b16 %v301
    %v978 = vunpack.c.l.b16 %v302
    %v979 = vunpack.c.l.b16 %v303
    %v980 = vunpack.c.h.b16 %v303
    %v981 = vunpack.c.l.b16 %v304
    %v982 = vunpack.c.l.b16 %v305
    %v983 = vunpack.c.h.b16 %v305
    %v984 = vunpack.c.l.b16 %v306
    %v985 = vunpack.c.l.b16 %v307
    %v986 = vunpack.c.h.b16 %v307
    %v987 = vunpack.c.l.b16 %v308
    %v988 = vunpack.c.l.b16 %v309
    %v989 = vunpack.c.h.b16 %v309
    %v990 = vunpack.c.l.b16 %v310
    %v991 = vunpack.c.l.b16 %v311
    %v992 = vunpack.c.h.b16 %v311
    %v993 = vunpack.c.l.b16 %v312
    %v994 = vunpack.c.l.b16 %v313
    %v995 = vunpack.c.h.b16 %v313
    %v996 = vunpack.c.l.b16 %v314
    %v997 = vunpack.c.l.b16 %v315
    %v998 = vunpack.c.h.b16 %v315
    %v999 = vunpack.c.l.b16 %v316
    %v1000 = vunpack.c.l.b16 %v317
    %v1001 = vunpack.c.h.b16 %v317
    %v1002 = vunpack.c.l.b16 %v318
    %v1003 = vunpack.c.l.b16 %v319
    %v1004 = vunpack.c.h.b16 %v319
    %v1005 = vunpack.c.l.b16 %v320
    %v1006 = vpack.c.b16 %v625, %v622
    %v1007 = vpack.c.b16 %v626, %v623
    %v1008 = vpack.c.b16 %v627, %v624
    %v1009 = vpack.c.b16 %v631, %v628
    %v1010 = vpack.c.b16 %v632, %v629
    %v1011 = vpack.c.b16 %v633, %v630
    %v1012 = vpack.c.b16 %v637, %v634
    %v1013 = vpack.c.b16 %v638, %v635
    %v1014 = vpack.c.b16 %v639, %v636
    %v1015 = vpack.c.b16 %v643, %v640
    %v1016 = vpack.c.b16 %v644, %v641
    %v1017 = vpack.c.b16 %v645, %v642
    %v1018 = vpack.c.b16 %v649, %v646
    %v1019 = vpack.c.b16 %v650, %v647
    %v1020 = vpack.c.b16 %v651, %v648
    %v1021 = vpack.c.b16 %v655, %v652
    %v1022 = vpack.c.b16 %v656, %v653
    %v1023 = vpack.c.b16 %v657, %v654
    %v1024 = vpack.c.b16 %v661, %v658
    %v1025 = vpack.c.b16 %v662, %v659
    %v1026 = vpack.c.b16 %v663, %v660
    %v1027 = vpack.c.b16 %v667, %v664
    %v1028 = vpack.c.b16 %v668, %v665
    %v1029 = vpack.c.b16 %v669, %v666
    %v1030 = vpack.c.b16 %v673, %v670
    %v1031 = vpack.c.b16 %v674, %v671
    %v1032 = vpack.c.b16 %v675, %v672
    %v1033 = vpack.c.b16 %v679, %v676
    %v1034 = vpack.c.b16 %v680, %v677
    %v1035 = vpack.c.b16 %v681, %v678
    %v1036 = vpack.c.b16 %v685, %v682
    %v1037 = vpack.c.b16 %v686, %v683
    %v1038 = vpack.c.b16 %v687, %v684
    %v1039 = vpack.c.b16 %v691, %v688
    %v1040 = vpack.c.b16 %v692, %v689
    %v1041 = vpack.c.b16 %v693, %v690
    %v1042 = vpack.c.b16 %v697, %v694
    %v1043 = vpack.c.b16 %v698, %v695
    %v1044 = vpack.c.b16 %v699, %v696
    %v1045 = vpack.c.b16 %v703, %v700
    %v1046 = vpack.c.b16 %v704, %v701
    %v1047 = vpack.c.b16 %v705, %v702
    %v1048 = vpack.c.b16 %v709, %v706
    %v1049 = vpack.c.b16 %v710, %v707
    %v1050 = vpack.c.b16 %v711, %v708
    %v1051 = vpack.c.b16 %v715, %v712
    %v1052 = vpack.c.b16 %v716, %v713
    %v1053 = vpack.c.b16 %v717, %v714
    %v1054 = vpack.c.b16 %v721, %v718
    %v1055 = vpack.c.b16 %v722, %v719
    %v1056 = vpack.c.b16 %v723, %v720
    %v1057 = vpack.c.b16 %v727, %v724
    %v1058 = vpack.c.b16 %v728, %v725
    %v1059 = vpack.c.b16 %v729, %v726
    %v1060 = vpack.c.b16 %v733, %v730
    %v1061 = vpack.c.b16 %v734, %v731
    %v1062 = vpack.c.b16 %v735, %v732
    %v1063 = vpack.c.b16 %v739, %v736
    %v1064 = vpack.c.b16 %v740, %v737
    %v1065 = vpack.c.b16 %v741, %v738
    %v1066 = vpack.c.b16 %v745, %v742
    %v1067 = vpack.c.b16 %v746, %v743
    %v1068 = vpack.c.b16 %v747, %v744
    %v1069 = vpack.c.b16 %v751, %v748
    %v1070 = vpack.c.b16 %v752, %v749
    %v1071 = vpack.c.b16 %v753, %v750
    %v1072 = vpack.c.b16 %v757, %v754
    %v1073 = vpack.c.b16 %v758, %v755
    %v1074 = vpack.c.b16 %v759, %v756
    %v1075 = vpack.c.b16 %v763, %v760
    %v1076 = vpack.c.b16 %v764, %v761
    %v1077 = vpack.c.b16 %v765, %v762
    %v1078 = vpack.c.b16 %v769, %v766
    %v1079 = vpack.c.b16 %v770, %v767
    %v1080 = vpack.c.b16 %v771, %v768
    %v1081 = vpack.c.b16 %v775, %v772
    %v1082 = vpack.c.b16 %v776, %v773
    %v1083 = vpack.c.b16 %v777, %v774
    %v1084 = vpack.c.b16 %v781, %v778
    %v1085 = vpack.c.b16 %v782, %v779
    %v1086 = vpack.c.b16 %v783, %v780
    %v1087 = vpack.c.b16 %v787, %v784
    %v1088 = vpack.c.b16 %v788, %v785
    %v1089 = vpack.c.b16 %v789, %v786
    %v1090 = vpack.c.b16 %v793, %v790
    %v1091 = vpack.c.b16 %v794, %v791
    %v1092 = vpack.c.b16 %v795, %v792
    %v1093 = vpack.c.b16 %v799, %v796
    %v1094 = vpack.c.b16 %v800, %v797
    %v1095 = vpack.c.b16 %v801, %v798
    %v1096 = vpack.c.b16 %v805, %v802
    %v1097 = vpack.c.b16 %v806, %v803
    %v1098 = vpack.c.b16 %v807, %v804
    %v1099 = vpack.c.b16 %v811, %v808
    %v1100 = vpack.c.b16 %v812, %v809
    %v1101 = vpack.c.b16 %v813, %v810
    %v1102 = vpack.c.b16 %v817, %v814
    %v1103 = vpack.c.b16 %v818, %v815
    %v1104 = vpack.c.b16 %v819, %v816
    %v1105 = vpack.c.b16 %v823, %v820
    %v1106 = vpack.c.b16 %v824, %v821
    %v1107 = vpack.c.b16 %v825, %v822
    %v1108 = vpack.c.b16 %v829, %v826
    %v1109 = vpack.c.b16 %v830, %v827
    %v1110 = vpack.c.b16 %v831, %v828
    %v1111 = vpack.c.b16 %v835, %v832
    %v1112 = vpack.c.b16 %v836, %v833
    %v1113 = vpack.c.b16 %v837, %v834
    %v1114 = vpack.c.b16 %v841, %v838
    %v1115 = vpack.c.b16 %v842, %v839
    %v1116 = vpack.c.b16 %v843, %v840
    %v1117 = vpack.c.b16 %v847, %v844
    %v1118 = vpack.c.b16 %v848, %v845
    %v1119 = vpack.c.b16 %v849, %v846
    %v1120 = vpack.c.b16 %v853, %v850
    %v1121 = vpack.c.b16 %v854, %v851
    %v1122 = vpack.c.b16 %v855, %v852
    %v1123 = vpack.c.b16 %v859, %v856
    %v1124 = vpack.c.b16 %v860, %v857
    %v1125 = vpack.c.b16 %v861, %v858
    %v1126 = vpack.c.b16 %v865, %v862
    %v1127 = vpack.c.b16 %v866, %v863
    %v1128 = vpack.c.b16 %v867, %v864
    %v1129 = vpack.c.b16 %v871, %v868
    %v1130 = vpack.c.b16 %v872, %v869
    %v1131 = vpack.c.b16 %v873, %v870
    %v1132 = vpack.c.b16 %v877, %v874
    %v1133 = vpack.c.b16 %v878, %v875
    %v1134 = vpack.c.b16 %v879, %v876
    %v1135 = vpack.c.b16 %v883, %v880
    %v1136 = vpack.c.b16 %v884, %v881
    %v1137 = vpack.c.b16 %v885, %v882
    %v1138 = vpack.c.b16 %v889, %v886
    %v1139 = vpack.c.b16 %v890, %v887
    %v1140 = vpack.c.b16 %v891, %v888
    %v1141 = vpack.c.b16 %v895, %v892
    %v1142 = vpack.c.b16 %v896, %v893
    %v1143 = vpack.c.b16 %v897, %v894
    %v1144 = vpack.c.b16 %v901, %v898
    %v1145 = vpack.c.b16 %v902, %v899
    %v1146 = vpack.c.b16 %v903, %v900
    %v1147 = vpack.c.b16 %v907, %v904
    %v1148 = vpack.c.b16 %v908, %v905
    %v1149 = vpack.c.b16 %v909, %v906
    %v1150 = vpack.c.b16 %v913, %v910
    %v1151 = vpack.c.b16 %v914, %v911
    %v1152 = vpack.c.b16 %v915, %v912
    %v1153 = vpack.c.b16 %v919, %v916
    %v1154 = vpack.c.b16 %v920, %v917
    %v1155 = vpack.c.b16 %v921, %v918
    %v1156 = vpack.c.b16 %v925, %v922
    %v1157 = vpack.c.b16 %v926, %v923
    %v1158 = vpack.c.b16 %v927, %v924
    %v1159 = vpack.c.b16 %v931, %v928
    %v1160 = vpack.c.b16 %v932, %v929
    %v1161 = vpack.c.b16 %v933, %v930
    %v1162 = vpack.c.b16 %v937, %v934
    %v1163 = vpack.c.b16 %v938, %v935
    %v1164 = vpack.c.b16 %v939, %v936
    %v1165 = vpack.c.b16 %v943, %v940
    %v1166 = vpack.c.b16 %v944, %v941
    %v1167 = vpack.c.b16 %v945, %v942
    %v1168 = vpack.c.b16 %v949, %v946
    %v1169 = vpack.c.b16 %v950, %v947
    %v1170 = vpack.c.b16 %v951, %v948
    %v1171 = vpack.c.b16 %v955, %v952
    %v1172 = vpack.c.b16 %v956, %v953
    %v1173 = vpack.c.b16 %v957, %v954
    %v1174 = vpack.c.b16 %v961, %v958
    %v1175 = vpack.c.b16 %v962, %v959
    %v1176 = vpack.c.b16 %v963, %v960
    %v1177 = vpack.c.b16 %v967, %v964
    %v1178 = vpack.c.b16 %v968, %v965
    %v1179 = vpack.c.b16 %v969, %v966
    %v1180 = vpack.c.b16 %v973, %v970
    %v1181 = vpack.c.b16 %v974, %v971
    %v1182 = vpack.c.b16 %v975, %v972
    %v1183 = vpack.c.b16 %v979, %v976
    %v1184 = vpack.c.b16 %v980, %v977
    %v1185 = vpack.c.b16 %v981, %v978
    %v1186 = vpack.c.b16 %v985, %v982
    %v1187 = vpack.c.b16 %v986, %v983
    %v1188 = vpack.c.b16 %v987, %v984
    %v1189 = vpack.c.b16 %v991, %v988
    %v1190 = vpack.c.b16 %v992, %v989
    %v1191 = vpack.c.b16 %v993, %v990
    %v1192 = vpack.c.b16 %v997, %v994
    %v1193 = vpack.c.b16 %v998, %v995
    %v1194 = vpack.c.b16 %v999, %v996
    %v1195 = vpack.c.b16 %v1003, %v1000
    %v1196 = vpack.c.b16 %v1004, %v1001
    %v1197 = vpack.c.b16 %v1005, %v1002
    %1390 = vmatprep.subr.bf16.mxu0 %v1028
    %1391 = vmatpush1.bf16.msra.mxu0 %v1027
    %1392 = vmatprep.subr.bf16.mxu0 %v1025
    %1393 = vmatpush1.bf16.msra.mxu0 %v1024
    %1394 = vmatprep.subr.bf16.mxu0 %v1022
    %1395 = vmatpush1.bf16.msra.mxu0 %v1021
    %1396 = vmatprep.subr.bf16.mxu0 %v1019
    %1397 = vmatpush1.bf16.msra.mxu0 %v1018
    %1398 = vmatprep.subr.bf16.mxu0 %v1016
    %1399 = vmatpush1.bf16.msra.mxu0 %v1015
    %1400 = vmatprep.subr.bf16.mxu0 %v1013
    %1401 = vmatpush1.bf16.msra.mxu0 %v1012
    %1402 = vmatprep.subr.bf16.mxu0 %v1010
    %1403 = vmatpush1.bf16.msra.mxu0 %v1009
    %1404 = vmatprep.subr.bf16.mxu0 %v1007
    %1405 = vmatpush1.bf16.msra.mxu0 %v1006
    %1406 = vmatprep.subr.bf16.mxu0 %v1052
    %1407 = vmatpush2.bf16.msra.mxu0 %v1051
    %1408 = vmatprep.subr.bf16.mxu0 %v1049
    %1409 = vmatpush2.bf16.msra.mxu0 %v1048
    %1410 = vmatprep.subr.bf16.mxu0 %v1046
    %1411 = vmatpush2.bf16.msra.mxu0 %v1045
    %1412 = vmatprep.subr.bf16.mxu0 %v1043
    %1413 = vmatpush2.bf16.msra.mxu0 %v1042
    %1414 = vmatprep.subr.bf16.mxu0 %v1040
    %1415 = vmatpush2.bf16.msra.mxu0 %v1039
    %1416 = vmatprep.subr.bf16.mxu0 %v1037
    %1417 = vmatpush2.bf16.msra.mxu0 %v1036
    %1418 = vmatprep.subr.bf16.mxu0 %v1034
    %1419 = vmatpush2.bf16.msra.mxu0 %v1033
    %1420 = vmatprep.subr.bf16.mxu0 %v1031
    %1421 = vmatpush2.bf16.msra.mxu0 %v1030
    %1422 = vmatprep.mubr.bf16.mxu0 %v351
    %1423 = vmatmul.mubr.bf16.gmra.mxu0 %v350
    %v1424 = vpop.f32.mrf.mxu0
    %v1425 = vadd.f32 %v326, %v1424
    %v1426 = vpop.f32.mrf.mxu0
    %v1427 = vadd.f32 %v330, %v1426
    %v1428 = vpop.f32.mrf.mxu0
    %v1429 = vpop.f32.mrf.mxu0
    %1430 = vdwg.mxu0
    %1431 = vmatprep.subr.bf16.mxu0 %v1076
    %1432 = vmatpush1.bf16.msra.mxu0 %v1075
    %1433 = vmatprep.subr.bf16.mxu0 %v1073
    %1434 = vmatpush1.bf16.msra.mxu0 %v1072
    %1435 = vmatprep.subr.bf16.mxu0 %v1070
    %1436 = vmatpush1.bf16.msra.mxu0 %v1069
    %1437 = vmatprep.subr.bf16.mxu0 %v1067
    %1438 = vmatpush1.bf16.msra.mxu0 %v1066
    %1439 = vmatprep.subr.bf16.mxu0 %v1064
    %1440 = vmatpush1.bf16.msra.mxu0 %v1063
    %1441 = vmatprep.subr.bf16.mxu0 %v1061
    %1442 = vmatpush1.bf16.msra.mxu0 %v1060
    %1443 = vmatprep.subr.bf16.mxu0 %v1058
    %1444 = vmatpush1.bf16.msra.mxu0 %v1057
    %1445 = vmatprep.subr.bf16.mxu0 %v1055
    %1446 = vmatpush1.bf16.msra.mxu0 %v1054
    %1447 = vmatprep.subr.bf16.mxu0 %v1100
    %1448 = vmatpush2.bf16.msra.mxu0 %v1099
    %1449 = vmatprep.subr.bf16.mxu0 %v1097
    %1450 = vmatpush2.bf16.msra.mxu0 %v1096
    %1451 = vmatprep.subr.bf16.mxu0 %v1094
    %1452 = vmatpush2.bf16.msra.mxu0 %v1093
    %1453 = vmatprep.subr.bf16.mxu0 %v1091
    %1454 = vmatpush2.bf16.msra.mxu0 %v1090
    %1455 = vmatprep.subr.bf16.mxu0 %v1088
    %1456 = vmatpush2.bf16.msra.mxu0 %v1087
    %1457 = vmatprep.subr.bf16.mxu0 %v1085
    %1458 = vmatpush2.bf16.msra.mxu0 %v1084
    %1459 = vmatprep.subr.bf16.mxu0 %v1082
    %1460 = vmatpush2.bf16.msra.mxu0 %v1081
    %1461 = vmatprep.subr.bf16.mxu0 %v1079
    %1462 = vmatpush2.bf16.msra.mxu0 %v1078
    %1463 = vmatprep.mubr.bf16.mxu0 %v353
    %1464 = vmatmul.mubr.bf16.gmra.mxu0 %v352
    %v1465 = vpop.f32.mrf.mxu0
    %v1466 = vadd.f32 %v1425, %v1465
    %v1467 = vpop.f32.mrf.mxu0
    %v1468 = vadd.f32 %v1427, %v1467
    %v1469 = vpop.f32.mrf.mxu0
    %v1470 = vpop.f32.mrf.mxu0
    %1471 = vdwg.mxu0
    %1472 = vmatprep.subr.bf16.mxu0 %v1124
    %1473 = vmatpush1.bf16.msra.mxu0 %v1123
    %1474 = vmatprep.subr.bf16.mxu0 %v1121
    %1475 = vmatpush1.bf16.msra.mxu0 %v1120
    %1476 = vmatprep.subr.bf16.mxu0 %v1118
    %1477 = vmatpush1.bf16.msra.mxu0 %v1117
    %1478 = vmatprep.subr.bf16.mxu0 %v1115
    %1479 = vmatpush1.bf16.msra.mxu0 %v1114
    %1480 = vmatprep.subr.bf16.mxu0 %v1112
    %1481 = vmatpush1.bf16.msra.mxu0 %v1111
    %1482 = vmatprep.subr.bf16.mxu0 %v1109
    %1483 = vmatpush1.bf16.msra.mxu0 %v1108
    %1484 = vmatprep.subr.bf16.mxu0 %v1106
    %1485 = vmatpush1.bf16.msra.mxu0 %v1105
    %1486 = vmatprep.subr.bf16.mxu0 %v1103
    %1487 = vmatpush1.bf16.msra.mxu0 %v1102
    %1488 = vmatprep.subr.bf16.mxu0 %v1148
    %1489 = vmatpush2.bf16.msra.mxu0 %v1147
    %1490 = vmatprep.subr.bf16.mxu0 %v1145
    %1491 = vmatpush2.bf16.msra.mxu0 %v1144
    %1492 = vmatprep.subr.bf16.mxu0 %v1142
    %1493 = vmatpush2.bf16.msra.mxu0 %v1141
    %1494 = vmatprep.subr.bf16.mxu0 %v1139
    %1495 = vmatpush2.bf16.msra.mxu0 %v1138
    %1496 = vmatprep.subr.bf16.mxu0 %v1136
    %1497 = vmatpush2.bf16.msra.mxu0 %v1135
    %1498 = vmatprep.subr.bf16.mxu0 %v1133
    %1499 = vmatpush2.bf16.msra.mxu0 %v1132
    %1500 = vmatprep.subr.bf16.mxu0 %v1130
    %1501 = vmatpush2.bf16.msra.mxu0 %v1129
    %1502 = vmatprep.subr.bf16.mxu0 %v1127
    %1503 = vmatpush2.bf16.msra.mxu0 %v1126
    %1504 = vmatprep.mubr.bf16.mxu0 %v355
    %1505 = vmatmul.mubr.bf16.gmra.mxu0 %v354
    %v1506 = vpop.f32.mrf.mxu0
    %v1507 = vadd.f32 %v1466, %v1506
    %v1508 = vpop.f32.mrf.mxu0
    %v1509 = vadd.f32 %v1468, %v1508
    %v1510 = vpop.f32.mrf.mxu0
    %v1511 = vpop.f32.mrf.mxu0
    %1512 = vdwg.mxu0
    %1513 = vmatprep.subr.bf16.mxu0 %v1172
    %1514 = vmatpush1.bf16.msra.mxu0 %v1171
    %1515 = vmatprep.subr.bf16.mxu0 %v1169
    %1516 = vmatpush1.bf16.msra.mxu0 %v1168
    %1517 = vmatprep.subr.bf16.mxu0 %v1166
    %1518 = vmatpush1.bf16.msra.mxu0 %v1165
    %1519 = vmatprep.subr.bf16.mxu0 %v1163
    %1520 = vmatpush1.bf16.msra.mxu0 %v1162
    %1521 = vmatprep.subr.bf16.mxu0 %v1160
    %1522 = vmatpush1.bf16.msra.mxu0 %v1159
    %1523 = vmatprep.subr.bf16.mxu0 %v1157
    %1524 = vmatpush1.bf16.msra.mxu0 %v1156
    %1525 = vmatprep.subr.bf16.mxu0 %v1154
    %1526 = vmatpush1.bf16.msra.mxu0 %v1153
    %1527 = vmatprep.subr.bf16.mxu0 %v1151
    %1528 = vmatpush1.bf16.msra.mxu0 %v1150
    %1529 = vmatprep.subr.bf16.mxu0 %v1196
    %1530 = vmatpush2.bf16.msra.mxu0 %v1195
    %1531 = vmatprep.subr.bf16.mxu0 %v1193
    %1532 = vmatpush2.bf16.msra.mxu0 %v1192
    %1533 = vmatprep.subr.bf16.mxu0 %v1190
    %1534 = vmatpush2.bf16.msra.mxu0 %v1189
    %1535 = vmatprep.subr.bf16.mxu0 %v1187
    %1536 = vmatpush2.bf16.msra.mxu0 %v1186
    %1537 = vmatprep.subr.bf16.mxu0 %v1184
    %1538 = vmatpush2.bf16.msra.mxu0 %v1183
    %1539 = vmatprep.subr.bf16.mxu0 %v1181
    %1540 = vmatpush2.bf16.msra.mxu0 %v1180
    %1541 = vmatprep.subr.bf16.mxu0 %v1178
    %1542 = vmatpush2.bf16.msra.mxu0 %v1177
    %1543 = vmatprep.subr.bf16.mxu0 %v1175
    %1544 = vmatpush2.bf16.msra.mxu0 %v1174
    %1545 = vmatprep.mubr.bf16.mxu0 %v357
    %1546 = vmatmul.mubr.bf16.gmra.mxu0 %v356
    %v1547 = vpop.f32.mrf.mxu0
    %v1548 = vadd.f32 %v1507, %v1547
    %v1549 = vpop.f32.mrf.mxu0
    %v1550 = vadd.f32 %v1509, %v1549
    %v1551 = vpop.f32.mrf.mxu0
    %v1552 = vpop.f32.mrf.mxu0
    %1553 = vdwg.mxu0
    %1554 = vmatprep.subr.bf16.mxu0 0
    %1555 = vmatpush1.bf16.msra.mxu0 %v1029
    %1556 = vmatprep.subr.bf16.mxu0 0
    %1557 = vmatpush1.bf16.msra.mxu0 %v1026
    %1558 = vmatprep.subr.bf16.mxu0 0
    %1559 = vmatpush1.bf16.msra.mxu0 %v1023
    %1560 = vmatprep.subr.bf16.mxu0 0
    %1561 = vmatpush1.bf16.msra.mxu0 %v1020
    %1562 = vmatprep.subr.bf16.mxu0 0
    %1563 = vmatpush1.bf16.msra.mxu0 %v1017
    %1564 = vmatprep.subr.bf16.mxu0 0
    %1565 = vmatpush1.bf16.msra.mxu0 %v1014
    %1566 = vmatprep.subr.bf16.mxu0 0
    %1567 = vmatpush1.bf16.msra.mxu0 %v1011
    %1568 = vmatprep.subr.bf16.mxu0 0
    %1569 = vmatpush1.bf16.msra.mxu0 %v1008
    %1570 = vmatprep.subr.bf16.mxu0 0
    %1571 = vmatpush2.bf16.msra.mxu0 %v1053
    %1572 = vmatprep.subr.bf16.mxu0 0
    %1573 = vmatpush2.bf16.msra.mxu0 %v1050
    %1574 = vmatprep.subr.bf16.mxu0 0
    %1575 = vmatpush2.bf16.msra.mxu0 %v1047
    %1576 = vmatprep.subr.bf16.mxu0 0
    %1577 = vmatpush2.bf16.msra.mxu0 %v1044
    %1578 = vmatprep.subr.bf16.mxu0 0
    %1579 = vmatpush2.bf16.msra.mxu0 %v1041
    %1580 = vmatprep.subr.bf16.mxu0 0
    %1581 = vmatpush2.bf16.msra.mxu0 %v1038
    %1582 = vmatprep.subr.bf16.mxu0 0
    %1583 = vmatpush2.bf16.msra.mxu0 %v1035
    %1584 = vmatprep.subr.bf16.mxu0 0
    %1585 = vmatpush2.bf16.msra.mxu0 %v1032
    %1586 = vmatprep.mubr.bf16.mxu0 %v351
    %1587 = vmatmul.mubr.bf16.gmra.mxu0 %v350
    %v1588 = vpop.f32.mrf.mxu0
    %v1589 = vadd.f32 %v334, %v1588
    %v1590 = vpop.f32.mrf.mxu0
    %v1591 = vpop.f32.mrf.mxu0
    %v1592 = vpop.f32.mrf.mxu0
    %1593 = vdwg.mxu0
    %1594 = vmatprep.subr.bf16.mxu0 0
    %1595 = vmatpush1.bf16.msra.mxu0 %v1077
    %1596 = vmatprep.subr.bf16.mxu0 0
    %1597 = vmatpush1.bf16.msra.mxu0 %v1074
    %1598 = vmatprep.subr.bf16.mxu0 0
    %1599 = vmatpush1.bf16.msra.mxu0 %v1071
    %1600 = vmatprep.subr.bf16.mxu0 0
    %1601 = vmatpush1.bf16.msra.mxu0 %v1068
    %1602 = vmatprep.subr.bf16.mxu0 0
    %1603 = vmatpush1.bf16.msra.mxu0 %v1065
    %1604 = vmatprep.subr.bf16.mxu0 0
    %1605 = vmatpush1.bf16.msra.mxu0 %v1062
    %1606 = vmatprep.subr.bf16.mxu0 0
    %1607 = vmatpush1.bf16.msra.mxu0 %v1059
    %1608 = vmatprep.subr.bf16.mxu0 0
    %1609 = vmatpush1.bf16.msra.mxu0 %v1056
    %1610 = vmatprep.subr.bf16.mxu0 0
    %1611 = vmatpush2.bf16.msra.mxu0 %v1101
    %1612 = vmatprep.subr.bf16.mxu0 0
    %1613 = vmatpush2.bf16.msra.mxu0 %v1098
    %1614 = vmatprep.subr.bf16.mxu0 0
    %1615 = vmatpush2.bf16.msra.mxu0 %v1095
    %1616 = vmatprep.subr.bf16.mxu0 0
    %1617 = vmatpush2.bf16.msra.mxu0 %v1092
    %1618 = vmatprep.subr.bf16.mxu0 0
    %1619 = vmatpush2.bf16.msra.mxu0 %v1089
    %1620 = vmatprep.subr.bf16.mxu0 0
    %1621 = vmatpush2.bf16.msra.mxu0 %v1086
    %1622 = vmatprep.subr.bf16.mxu0 0
    %1623 = vmatpush2.bf16.msra.mxu0 %v1083
    %1624 = vmatprep.subr.bf16.mxu0 0
    %1625 = vmatpush2.bf16.msra.mxu0 %v1080
    %1626 = vmatprep.mubr.bf16.mxu0 %v353
    %1627 = vmatmul.mubr.bf16.gmra.mxu0 %v352
    %v1628 = vpop.f32.mrf.mxu0
    %v1629 = vadd.f32 %v1589, %v1628
    %v1630 = vpop.f32.mrf.mxu0
    %v1631 = vpop.f32.mrf.mxu0
    %v1632 = vpop.f32.mrf.mxu0
    %1633 = vdwg.mxu0
    %1634 = vmatprep.subr.bf16.mxu0 0
    %1635 = vmatpush1.bf16.msra.mxu0 %v1125
    %1636 = vmatprep.subr.bf16.mxu0 0
    %1637 = vmatpush1.bf16.msra.mxu0 %v1122
    %1638 = vmatprep.subr.bf16.mxu0 0
    %1639 = vmatpush1.bf16.msra.mxu0 %v1119
    %1640 = vmatprep.subr.bf16.mxu0 0
    %1641 = vmatpush1.bf16.msra.mxu0 %v1116
    %1642 = vmatprep.subr.bf16.mxu0 0
    %1643 = vmatpush1.bf16.msra.mxu0 %v1113
    %1644 = vmatprep.subr.bf16.mxu0 0
    %1645 = vmatpush1.bf16.msra.mxu0 %v1110
    %1646 = vmatprep.subr.bf16.mxu0 0
    %1647 = vmatpush1.bf16.msra.mxu0 %v1107
    %1648 = vmatprep.subr.bf16.mxu0 0
    %1649 = vmatpush1.bf16.msra.mxu0 %v1104
    %1650 = vmatprep.subr.bf16.mxu0 0
    %1651 = vmatpush2.bf16.msra.mxu0 %v1149
    %1652 = vmatprep.subr.bf16.mxu0 0
    %1653 = vmatpush2.bf16.msra.mxu0 %v1146
    %1654 = vmatprep.subr.bf16.mxu0 0
    %1655 = vmatpush2.bf16.msra.mxu0 %v1143
    %1656 = vmatprep.subr.bf16.mxu0 0
    %1657 = vmatpush2.bf16.msra.mxu0 %v1140
    %1658 = vmatprep.subr.bf16.mxu0 0
    %1659 = vmatpush2.bf16.msra.mxu0 %v1137
    %1660 = vmatprep.subr.bf16.mxu0 0
    %1661 = vmatpush2.bf16.msra.mxu0 %v1134
    %1662 = vmatprep.subr.bf16.mxu0 0
    %1663 = vmatpush2.bf16.msra.mxu0 %v1131
    %1664 = vmatprep.subr.bf16.mxu0 0
    %1665 = vmatpush2.bf16.msra.mxu0 %v1128
    %1666 = vmatprep.mubr.bf16.mxu0 %v355
    %1667 = vmatmul.mubr.bf16.gmra.mxu0 %v354
    %v1668 = vpop.f32.mrf.mxu0
    %v1669 = vadd.f32 %v1629, %v1668
    %v1670 = vpop.f32.mrf.mxu0
    %v1671 = vpop.f32.mrf.mxu0
    %v1672 = vpop.f32.mrf.mxu0
    %1673 = vdwg.mxu0
    %1674 = vmatprep.subr.bf16.mxu0 0
    %1675 = vmatpush1.bf16.msra.mxu0 %v1173
    %1676 = vmatprep.subr.bf16.mxu0 0
    %1677 = vmatpush1.bf16.msra.mxu0 %v1170
    %1678 = vmatprep.subr.bf16.mxu0 0
    %1679 = vmatpush1.bf16.msra.mxu0 %v1167
    %1680 = vmatprep.subr.bf16.mxu0 0
    %1681 = vmatpush1.bf16.msra.mxu0 %v1164
    %1682 = vmatprep.subr.bf16.mxu0 0
    %1683 = vmatpush1.bf16.msra.mxu0 %v1161
    %1684 = vmatprep.subr.bf16.mxu0 0
    %1685 = vmatpush1.bf16.msra.mxu0 %v1158
    %1686 = vmatprep.subr.bf16.mxu0 0
    %1687 = vmatpush1.bf16.msra.mxu0 %v1155
    %1688 = vmatprep.subr.bf16.mxu0 0
    %1689 = vmatpush1.bf16.msra.mxu0 %v1152
    %1690 = vmatprep.subr.bf16.mxu0 0
    %1691 = vmatpush2.bf16.msra.mxu0 %v1197
    %1692 = vmatprep.subr.bf16.mxu0 0
    %1693 = vmatpush2.bf16.msra.mxu0 %v1194
    %1694 = vmatprep.subr.bf16.mxu0 0
    %1695 = vmatpush2.bf16.msra.mxu0 %v1191
    %1696 = vmatprep.subr.bf16.mxu0 0
    %1697 = vmatpush2.bf16.msra.mxu0 %v1188
    %1698 = vmatprep.subr.bf16.mxu0 0
    %1699 = vmatpush2.bf16.msra.mxu0 %v1185
    %1700 = vmatprep.subr.bf16.mxu0 0
    %1701 = vmatpush2.bf16.msra.mxu0 %v1182
    %1702 = vmatprep.subr.bf16.mxu0 0
    %1703 = vmatpush2.bf16.msra.mxu0 %v1179
    %1704 = vmatprep.subr.bf16.mxu0 0
    %1705 = vmatpush2.bf16.msra.mxu0 %v1176
    %1706 = vmatprep.mubr.bf16.mxu0 %v357
    %1707 = vmatmul.mubr.bf16.gmra.mxu0 %v356
    %v1708 = vpop.f32.mrf.mxu0
    %v1709 = vadd.f32 %v1669, %v1708
    %v1710 = vpop.f32.mrf.mxu0
    %v1711 = vpop.f32.mrf.mxu0
    %v1712 = vpop.f32.mrf.mxu0
    %1713 = vdwg.mxu0
    %v1714 = vmax.f32 %v1548, 0.0
    %v1715 = vmax.f32 %v1550, 0.0
    %v1716 = vmax.f32 %v1709, 0.0
    %v1717 = vpack.c.bf16 %v1714, %v1714
    %v1718 = vpack.c.bf16 %v1715, %v1715
    %v1719 = vpack.c.bf16 %v1716, %v1716
    %v1720 = vld [vmem:[#allocation7] sm:$0xf]
    %v1721 = vld [vmem:[#allocation7 + $0x4] sm:$0xf]
    %v1722 = vld [vmem:[#allocation7 + $0x8] sm:$0xf]
    %v1723 = vld [vmem:[#allocation7 + $0xc] sm:$0xf]
    %v1724 = vld [vmem:[#allocation7 + $0x10] sm:$0xf]
    %v1725 = vld [vmem:[#allocation7 + $0x14] sm:$0xf]
    %v1726 = vld [vmem:[#allocation7 + $0x18] sm:$0xf]
    %v1727 = vld [vmem:[#allocation7 + $0x1c] sm:$0xf]
    %v1728 = vld [vmem:[#allocation7 + $0x20] sm:$0xf]
    %v1729 = vld [vmem:[#allocation7 + $0x24] sm:$0xf]
    %v1730 = vld [vmem:[#allocation7 + $0x28] sm:$0xf]
    %v1731 = vld [vmem:[#allocation7 + $0x2c] sm:$0xf]
    %v1732 = vld [vmem:[#allocation7 + $0x30] sm:$0xf]
    %v1733 = vld [vmem:[#allocation7 + $0x34] sm:$0xf]
    %v1734 = vld [vmem:[#allocation7 + $0x38] sm:$0xf]
    %v1735 = vld [vmem:[#allocation7 + $0x3c] sm:$0xf]
    %v1736 = vld [vmem:[#allocation7 + $0x40] sm:$0xf]
    %v1737 = vld [vmem:[#allocation7 + $0x44] sm:$0xf]
    %v1738 = vld [vmem:[#allocation7 + $0x48] sm:$0xf]
    %v1739 = vld [vmem:[#allocation7 + $0x4c] sm:$0xf]
    %v1740 = vld [vmem:[#allocation7 + $0x50] sm:$0xf]
    %v1741 = vld [vmem:[#allocation7 + $0x54] sm:$0xf]
    %v1742 = vld [vmem:[#allocation7 + $0x58] sm:$0xf]
    %v1743 = vld [vmem:[#allocation7 + $0x5c] sm:$0xf]
    %v1744 = vld [vmem:[#allocation7 + $0x60] sm:$0xf]
    %v1745 = vld [vmem:[#allocation7 + $0x64] sm:$0xf]
    %v1746 = vld [vmem:[#allocation7 + $0x68] sm:$0xf]
    %v1747 = vld [vmem:[#allocation7 + $0x6c] sm:$0xf]
    %v1748 = vld [vmem:[#allocation7 + $0x70] sm:$0xf]
    %v1749 = vld [vmem:[#allocation7 + $0x74] sm:$0xf]
    %v1750 = vld [vmem:[#allocation7 + $0x78] sm:$0xf]
    %v1751 = vld [vmem:[#allocation7 + $0x7c] sm:$0xf]
    %v1752 = vld [vmem:[#allocation7 + $0x80] sm:$0xf]
    %v1753 = vld [vmem:[#allocation7 + $0x84] sm:$0xf]
    %v1754 = vld [vmem:[#allocation7 + $0x88] sm:$0xf]
    %v1755 = vld [vmem:[#allocation7 + $0x8c] sm:$0xf]
    %v1756 = vld [vmem:[#allocation7 + $0x90] sm:$0xf]
    %v1757 = vld [vmem:[#allocation7 + $0x94] sm:$0xf]
    %v1758 = vld [vmem:[#allocation7 + $0x98] sm:$0xf]
    %v1759 = vld [vmem:[#allocation7 + $0x9c] sm:$0xf]
    %v1760 = vld [vmem:[#allocation7 + $0xa0] sm:$0xf]
    %v1761 = vld [vmem:[#allocation7 + $0xa4] sm:$0xf]
    %v1762 = vld [vmem:[#allocation7 + $0xa8] sm:$0xf]
    %v1763 = vld [vmem:[#allocation7 + $0xac] sm:$0xf]
    %v1764 = vld [vmem:[#allocation7 + $0xb0] sm:$0xf]
    %v1765 = vld [vmem:[#allocation7 + $0xb4] sm:$0xf]
    %v1766 = vld [vmem:[#allocation7 + $0xb8] sm:$0xf]
    %v1767 = vld [vmem:[#allocation7 + $0xbc] sm:$0xf]
    %v1768 = vld [vmem:[%s4] sm:$0x1]
    %v1770 = vlaneseq
    %v1771 = vshrl.u32 %v1770, 7
    %v1772 = vsub.s32 0, %v1771
    %v1773 = vrot.slane %v1768, %v1772
    %v1823 = vunpack.c.l.b16 %v1720
    %v1824 = vunpack.c.l.b16 %v1721
    %v1825 = vunpack.c.l.b16 %v1722
    %v1826 = vunpack.c.l.b16 %v1723
    %v1827 = vunpack.c.l.b16 %v1724
    %v1828 = vunpack.c.l.b16 %v1725
    %v1829 = vunpack.c.l.b16 %v1726
    %v1830 = vunpack.c.l.b16 %v1727
    %v1831 = vunpack.c.l.b16 %v1728
    %v1832 = vunpack.c.l.b16 %v1729
    %v1833 = vunpack.c.l.b16 %v1730
    %v1834 = vunpack.c.l.b16 %v1731
    %v1835 = vunpack.c.l.b16 %v1732
    %v1836 = vunpack.c.l.b16 %v1733
    %v1837 = vunpack.c.l.b16 %v1734
    %v1838 = vunpack.c.l.b16 %v1735
    %v1839 = vunpack.c.l.b16 %v1736
    %v1840 = vunpack.c.l.b16 %v1737
    %v1841 = vunpack.c.l.b16 %v1738
    %v1842 = vunpack.c.l.b16 %v1739
    %v1843 = vunpack.c.l.b16 %v1740
    %v1844 = vunpack.c.l.b16 %v1741
    %v1845 = vunpack.c.l.b16 %v1742
    %v1846 = vunpack.c.l.b16 %v1743
    %v1847 = vunpack.c.l.b16 %v1744
    %v1848 = vunpack.c.l.b16 %v1745
    %v1849 = vunpack.c.l.b16 %v1746
    %v1850 = vunpack.c.l.b16 %v1747
    %v1851 = vunpack.c.l.b16 %v1748
    %v1852 = vunpack.c.l.b16 %v1749
    %v1853 = vunpack.c.l.b16 %v1750
    %v1854 = vunpack.c.l.b16 %v1751
    %v1855 = vunpack.c.l.b16 %v1752
    %v1856 = vunpack.c.l.b16 %v1753
    %v1857 = vunpack.c.l.b16 %v1754
    %v1858 = vunpack.c.l.b16 %v1755
    %v1859 = vunpack.c.l.b16 %v1756
    %v1860 = vunpack.c.l.b16 %v1757
    %v1861 = vunpack.c.l.b16 %v1758
    %v1862 = vunpack.c.l.b16 %v1759
    %v1863 = vunpack.c.l.b16 %v1760
    %v1864 = vunpack.c.l.b16 %v1761
    %v1865 = vunpack.c.l.b16 %v1762
    %v1866 = vunpack.c.l.b16 %v1763
    %v1867 = vunpack.c.l.b16 %v1764
    %v1868 = vunpack.c.l.b16 %v1765
    %v1869 = vunpack.c.l.b16 %v1766
    %v1870 = vunpack.c.l.b16 %v1767
    %v1871 = vpack.c.b16 %v1824, %v1823
    %v1872 = vpack.c.b16 %v1826, %v1825
    %v1873 = vpack.c.b16 %v1828, %v1827
    %v1874 = vpack.c.b16 %v1830, %v1829
    %v1875 = vpack.c.b16 %v1832, %v1831
    %v1876 = vpack.c.b16 %v1834, %v1833
    %v1877 = vpack.c.b16 %v1836, %v1835
    %v1878 = vpack.c.b16 %v1838, %v1837
    %v1879 = vpack.c.b16 %v1840, %v1839
    %v1880 = vpack.c.b16 %v1842, %v1841
    %v1881 = vpack.c.b16 %v1844, %v1843
    %v1882 = vpack.c.b16 %v1846, %v1845
    %v1883 = vpack.c.b16 %v1848, %v1847
    %v1884 = vpack.c.b16 %v1850, %v1849
    %v1885 = vpack.c.b16 %v1852, %v1851
    %v1886 = vpack.c.b16 %v1854, %v1853
    %v1887 = vpack.c.b16 %v1856, %v1855
    %v1888 = vpack.c.b16 %v1858, %v1857
    %v1889 = vpack.c.b16 %v1860, %v1859
    %v1890 = vpack.c.b16 %v1862, %v1861
    %v1891 = vpack.c.b16 %v1864, %v1863
    %v1892 = vpack.c.b16 %v1866, %v1865
    %v1893 = vpack.c.b16 %v1868, %v1867
    %v1894 = vpack.c.b16 %v1870, %v1869
    %1919 = vmatprep.subr.bf16.mxu0 0
    %1920 = vmatpush1.bf16.msra.mxu0 %v1878
    %1921 = vmatprep.subr.bf16.mxu0 0
    %1922 = vmatpush1.bf16.msra.mxu0 %v1877
    %1923 = vmatprep.subr.bf16.mxu0 0
    %1924 = vmatpush1.bf16.msra.mxu0 %v1876
    %1925 = vmatprep.subr.bf16.mxu0 0
    %1926 = vmatpush1.bf16.msra.mxu0 %v1875
    %1927 = vmatprep.subr.bf16.mxu0 0
    %1928 = vmatpush1.bf16.msra.mxu0 %v1874
    %1929 = vmatprep.subr.bf16.mxu0 0
    %1930 = vmatpush1.bf16.msra.mxu0 %v1873
    %1931 = vmatprep.subr.bf16.mxu0 0
    %1932 = vmatpush1.bf16.msra.mxu0 %v1872
    %1933 = vmatprep.subr.bf16.mxu0 0
    %1934 = vmatpush1.bf16.msra.mxu0 %v1871
    %1935 = vmatprep.subr.bf16.mxu0 0
    %1936 = vmatpush2.bf16.msra.mxu0 %v1886
    %1937 = vmatprep.subr.bf16.mxu0 0
    %1938 = vmatpush2.bf16.msra.mxu0 %v1885
    %1939 = vmatprep.subr.bf16.mxu0 0
    %1940 = vmatpush2.bf16.msra.mxu0 %v1884
    %1941 = vmatprep.subr.bf16.mxu0 0
    %1942 = vmatpush2.bf16.msra.mxu0 %v1883
    %1943 = vmatprep.subr.bf16.mxu0 0
    %1944 = vmatpush2.bf16.msra.mxu0 %v1882
    %1945 = vmatprep.subr.bf16.mxu0 0
    %1946 = vmatpush2.bf16.msra.mxu0 %v1881
    %1947 = vmatprep.subr.bf16.mxu0 0
    %1948 = vmatpush2.bf16.msra.mxu0 %v1880
    %1949 = vmatprep.subr.bf16.mxu0 0
    %1950 = vmatpush2.bf16.msra.mxu0 %v1879
    %1951 = vmatprep.mubr.bf16.mxu0 %v1718
    %1952 = vmatmul.mubr.bf16.gmra.mxu0 %v1717
    %v1953 = vpop.f32.mrf.mxu0
    %v1954 = vadd.f32 %v1773, %v1953
    %v1955 = vpop.f32.mrf.mxu0
    %v1956 = vpop.f32.mrf.mxu0
    %v1957 = vpop.f32.mrf.mxu0
    %1958 = vdwg.mxu0
    %1959 = vmatprep.subr.bf16.mxu0 0
    %1960 = vmatpush1.bf16.msra.mxu0 %v1894
    %1961 = vmatprep.subr.bf16.mxu0 0
    %1962 = vmatpush1.bf16.msra.mxu0 %v1893
    %1963 = vmatprep.subr.bf16.mxu0 0
    %1964 = vmatpush1.bf16.msra.mxu0 %v1892
    %1965 = vmatprep.subr.bf16.mxu0 0
    %1966 = vmatpush1.bf16.msra.mxu0 %v1891
    %1967 = vmatprep.subr.bf16.mxu0 0
    %1968 = vmatpush1.bf16.msra.mxu0 %v1890
    %1969 = vmatprep.subr.bf16.mxu0 0
    %1970 = vmatpush1.bf16.msra.mxu0 %v1889
    %1971 = vmatprep.subr.bf16.mxu0 0
    %1972 = vmatpush1.bf16.msra.mxu0 %v1888
    %1973 = vmatprep.subr.bf16.mxu0 0
    %1974 = vmatpush1.bf16.msra.mxu0 %v1887
    %1975 = vmatprep.subr.bf16.mxu0 0
    %1976 = vmatpush2.bf16.msra.mxu0 0
    %1977 = vmatprep.subr.bf16.mxu0 0
    %1978 = vmatpush2.bf16.msra.mxu0 0
    %1979 = vmatprep.subr.bf16.mxu0 0
    %1980 = vmatpush2.bf16.msra.mxu0 0
    %1981 = vmatprep.subr.bf16.mxu0 0
    %1982 = vmatpush2.bf16.msra.mxu0 0
    %1983 = vmatprep.subr.bf16.mxu0 0
    %1984 = vmatpush2.bf16.msra.mxu0 0
    %1985 = vmatprep.subr.bf16.mxu0 0
    %1986 = vmatpush2.bf16.msra.mxu0 0
    %1987 = vmatprep.subr.bf16.mxu0 0
    %1988 = vmatpush2.bf16.msra.mxu0 0
    %1989 = vmatprep.subr.bf16.mxu0 0
    %1990 = vmatpush2.bf16.msra.mxu0 0
    %1991 = vmatprep.mubr.bf16.mxu0 0
    %1992 = vmatmul.mubr.bf16.gmra.mxu0 %v1719
    %v1993 = vpop.f32.mrf.mxu0
    %v1994 = vadd.f32 %v1954, %v1993
    %v1995 = vpop.f32.mrf.mxu0
    %v1996 = vpop.f32.mrf.mxu0
    %v1997 = vpop.f32.mrf.mxu0
    %1998 = vdwg.mxu0
    %v1999 = vpack.c.bf16 %v1994, %v1994
    %2000 = vst [vmem:[#allocation8] sm:$0xf] %v1999
    // Predicated region
    $region34: #{tpu_custom_call.1} parent=1 // pred_check
      _
    $region35: #{tpu_custom_call.1} parent=1 // pred_check_branch
      %2002 = sbr.rel (0) target = $region37
    $region36: #{tpu_custom_call.1} parent=1 // pred_region
      %s2004 = ssub.s32 64, 64
      %2005 = vsyncadd [#allocation4], %s2004
      %s2007 = sshll.u32 [#allocation8], 4
      %s2008 = int_to_ptr.vmem [resolvable:$true] %s2007
      %2010 = dma.vmem_to_hbm [thread:$0]  %s2008, 64, %s5, [#allocation4]
    $region37: #{tpu_custom_call.1} parent=1 // pred_fallthru
      _
    // Predicated region
    $region38: #{tpu_custom_call.1} parent=1 // pred_check
      _
    $region39: #{tpu_custom_call.1} parent=1 // pred_check_branch
      %2012 = sbr.rel (0) target = $region41
    $region40: #{tpu_custom_call.1} parent=1 // pred_region
      %2013 = dma.done [#allocation4], 64
    $region41: #{tpu_custom_call.1} parent=1 // pred_fallthru
      _
    %2014 = vsyncpa [#allocation3], 1
    %2015 = vsyncpa [#allocation6], 1
    %2016 = vsyncpa [#allocation4], 1

</llo_original>
